<compile_context>
chip_gen: v5e
topology: v5e:2x2
jax: 0.10.0
libtpu: 0.0.40
codegen_flags: <defaults>
</compile_context>

<pallas_src>
import jax
import jax.numpy as jnp
from jax.experimental import pallas as pl
from jax.experimental.pallas import tpu as pltpu


def _round_up(x, m):
    return ((x + m - 1) // m) * m


def _edge_mlp_kernel(x_ref, w1_ref, b1_ref, w2_ref, b2_ref, w3_ref, b3_ref,
                     o_ref):
    """Fused 3-layer MLP on one (tm, d_pad) row tile: (Linear+ReLU) x2 -> Linear.

    All matmuls run on the MXU in the compute dtype (bf16) with f32
    accumulation; bias + ReLU epilogues stay in f32 (safe on v5e's f32-only VPU).
    Dropout(p) is identity at inference.
    """
    f32 = jnp.float32
    h1 = jnp.dot(x_ref[...], w1_ref[...], preferred_element_type=f32)
    h1 = jnp.maximum(h1 + b1_ref[...], 0.0)                       # ReLU
    h2 = jnp.dot(h1.astype(w2_ref.dtype), w2_ref[...], preferred_element_type=f32)
    h2 = jnp.maximum(h2 + b2_ref[...], 0.0)                       # ReLU
    out = jnp.dot(h2.astype(w3_ref.dtype), w3_ref[...], preferred_element_type=f32)
    o_ref[...] = (out + b3_ref[...]).astype(o_ref.dtype)


def _choose_tm(num_edges, tm_target):
    # Big tile to amortize per-grid-step overhead, but keep >= 2 grid steps so
    # both v7x TensorCores are used ("parallel" grid axis).
    tm = min(tm_target, _round_up(pl.cdiv(num_edges, 2), 512))
    # Tiny-E clamp; 32 is a safe sublane multiple for bf16 (16-row packing).
    tm = min(tm, _round_up(num_edges, 32))
    return max(tm, 32)


def edge_mlp_pallas(x_packed, w1p, b1, w2, b2, w3, b3, *,
                    tm_target=4096, out_dtype=jnp.float32):
    """Run the fused MLP over a packed (E, d_pad) activation matrix."""
    E, d_pad = x_packed.shape
    d_out = w3.shape[1]

    tm = _choose_tm(E, tm_target)
    grid = (pl.cdiv(E, tm),)

    full = lambda a: pl.BlockSpec(a.shape, lambda i: (0, 0))   # VMEM-resident

    return pl.pallas_call(
        _edge_mlp_kernel,
        out_shape=jax.ShapeDtypeStruct((E, d_out), out_dtype),
        grid_spec=pltpu.PrefetchScalarGridSpec(
            num_scalar_prefetch=0,
            grid=grid,
            in_specs=[
                pl.BlockSpec((tm, d_pad), lambda i: (i, 0)),   # packed activations
                full(w1p), full(b1),
                full(w2), full(b2),
                full(w3), full(b3),
            ],
            out_specs=pl.BlockSpec((tm, d_out), lambda i: (i, 0)),
        ),
        compiler_params=pltpu.CompilerParams(
            dimension_semantics=("parallel",)),
    )(x_packed, w1p, b1, w2, b2, w3, b3)


def edge_model_forward(params, src, dest, edge_attr, u, batch, *,
                       tm_target=4096, compute_dtype=jnp.bfloat16,
                       out_dtype=jnp.float32):
    """Full EdgeModel.forward.

    Builds ONE packed bf16 activation matrix [src|dest|edge_attr|u[batch]],
    zero-padded to a lane-friendly width, in a single fused XLA op (absorbs
    the gather, the concat, the bf16 cast and the pad), then runs the fused
    3-layer MLP Pallas kernel.
    """
    w1, b1, w2, b2, w3, b3 = params
    d_in = w1.shape[0]
    cd = compute_dtype

    d_pad = _round_up(d_in, 32)

    x = jnp.concatenate(
        [src, dest, edge_attr, jnp.take(u, batch, axis=0)], axis=1).astype(cd)
    if d_pad > d_in:
        x = jnp.pad(x, ((0, 0), (0, d_pad - d_in)))

    # Zero-pad W1's rows to match the packed input width (zero columns of x
    # line up with zero rows of W1, so the extra lanes contribute nothing).
    w1p = jnp.pad(w1, ((0, d_pad - d_in), (0, 0))).astype(cd)

    b1 = jnp.reshape(b1, (1, -1)).astype(jnp.float32)
    b2 = jnp.reshape(b2, (1, -1)).astype(jnp.float32)
    b3 = jnp.reshape(b3, (1, -1)).astype(jnp.float32)

    return edge_mlp_pallas(x, w1p, b1, w2.astype(cd), b2, w3.astype(cd), b3,
                           tm_target=tm_target, out_dtype=out_dtype)


def _linear_init(key, fan_in, fan_out):
    """Deterministic PyTorch-style Linear init (uniform +-1/sqrt(fan_in))."""
    kw, kb = jax.random.split(key)
    bound = 1.0 / jnp.sqrt(jnp.asarray(fan_in, jnp.float32))
    w = jax.random.uniform(kw, (fan_in, fan_out), jnp.float32, -bound, bound)
    b = jax.random.uniform(kb, (1, fan_out), jnp.float32, -bound, bound)
    return w, b


if __name__ == "__main__":
    # Small, shape-consistent config (grid of 2 parallel steps at tm=512).
    node_in = 8
    edge_in = 6
    global_in = 4
    edge_out = 16
    message_feats = 32
    num_edges = 1024
    num_graphs = 2

    d_in = 2 * node_in + edge_in + global_in  # 26

    key = jax.random.PRNGKey(0)
    k_src, k_dst, k_edge, k_u, k_p1, k_p2, k_p3 = jax.random.split(key, 7)

    src = jax.random.normal(k_src, (num_edges, node_in), jnp.float32)
    dest = jax.random.normal(k_dst, (num_edges, node_in), jnp.float32)
    edge_attr = jax.random.normal(k_edge, (num_edges, edge_in), jnp.float32)
    u = jax.random.normal(k_u, (num_graphs, global_in), jnp.float32)
    # batch: graph assignment per edge (first half graph 0, second half graph 1)
    batch = jnp.concatenate([
        jnp.zeros((num_edges // 2,), jnp.int32),
        jnp.ones((num_edges - num_edges // 2,), jnp.int32),
    ])

    # Deterministic parameters (Linear layer shapes from EdgeModel.__init__).
    w1, b1 = _linear_init(k_p1, d_in, message_feats)
    w2, b2 = _linear_init(k_p2, message_feats, message_feats)
    w3, b3 = _linear_init(k_p3, message_feats, edge_out)
    params = (w1, b1, w2, b2, w3, b3)

    fwd = jax.jit(edge_model_forward)
    out = jax.block_until_ready(fwd(params, src, dest, edge_attr, u, batch))
    assert out.shape == (num_edges, edge_out)
    assert out.dtype == jnp.float32

    # Reference 1: precision-matched pure-JAX reference (same bf16 cast points,
    # f32 accumulation) -- tight check.
    bf = jnp.bfloat16
    x_f32 = jnp.concatenate([src, dest, edge_attr, u[batch]], 1)
    xb = x_f32.astype(bf)
    h = jnp.maximum(jnp.dot(xb, w1.astype(bf),
                            preferred_element_type=jnp.float32) + b1, 0.0)
    h = jnp.maximum(jnp.dot(h.astype(bf), w2.astype(bf),
                            preferred_element_type=jnp.float32) + b2, 0.0)
    ref_matched = jnp.dot(h.astype(bf), w3.astype(bf),
                          preferred_element_type=jnp.float32) + b3
    assert jnp.allclose(out, ref_matched, atol=2e-3, rtol=2e-3), \
        "mismatch vs precision-matched reference"

    # Reference 2: full-f32 PyTorch-equivalent reference -- loose check
    # (bounds the bf16 quantization error of the fast path).
    hf = jnp.maximum(x_f32 @ w1 + b1, 0.0)
    hf = jnp.maximum(hf @ w2 + b2, 0.0)
    ref_f32 = hf @ w3 + b3
    assert jnp.allclose(out, ref_f32, atol=5e-2, rtol=5e-2), \
        "mismatch vs f32 reference beyond bf16 tolerance"

    print("KERNEL_OK")
</pallas_src>

<mosaic_0001>
module attributes {stable_mosaic.version = 11 : i64} {
  func.func @_edge_mlp_kernel(%arg0: i32, %arg1: memref<512x32xbf16, #tpu.memory_space<vmem>>, %arg2: memref<32x32xbf16, #tpu.memory_space<vmem>>, %arg3: memref<1x32xf32, #tpu.memory_space<vmem>>, %arg4: memref<32x32xbf16, #tpu.memory_space<vmem>>, %arg5: memref<1x32xf32, #tpu.memory_space<vmem>>, %arg6: memref<32x16xbf16, #tpu.memory_space<vmem>>, %arg7: memref<1x16xf32, #tpu.memory_space<vmem>>, %arg8: memref<512x16xf32, #tpu.memory_space<vmem>>) attributes {dimension_semantics = [#tpu.dimension_semantics<parallel>], iteration_bounds = array<i64: 2>, scalar_prefetch = 0 : i64, scratch_operands = 0 : i64, tpu.core_type = #tpu.core_type<tc>, window_params = [{transform_indices = @transform_0, window_bounds = array<i64: 512, 32>}, {pipeline_mode = #tpu.pipeline_mode<synchronous>, transform_indices = @transform_1, window_bounds = array<i64: 32, 32>}, {pipeline_mode = #tpu.pipeline_mode<synchronous>, transform_indices = @transform_2, window_bounds = array<i64: 1, 32>}, {pipeline_mode = #tpu.pipeline_mode<synchronous>, transform_indices = @transform_3, window_bounds = array<i64: 32, 32>}, {pipeline_mode = #tpu.pipeline_mode<synchronous>, transform_indices = @transform_4, window_bounds = array<i64: 1, 32>}, {pipeline_mode = #tpu.pipeline_mode<synchronous>, transform_indices = @transform_5, window_bounds = array<i64: 32, 16>}, {pipeline_mode = #tpu.pipeline_mode<synchronous>, transform_indices = @transform_6, window_bounds = array<i64: 1, 16>}, {transform_indices = @transform_7, window_bounds = array<i64: 512, 16>}]} {
    %c0 = arith.constant 0 : index
    %c0_0 = arith.constant 0 : index
    %0 = vector.load %arg1[%c0, %c0_0] : memref<512x32xbf16, #tpu.memory_space<vmem>>, vector<512x32xbf16>
    %c0_1 = arith.constant 0 : index
    %c0_2 = arith.constant 0 : index
    %1 = vector.load %arg2[%c0_1, %c0_2] : memref<32x32xbf16, #tpu.memory_space<vmem>>, vector<32x32xbf16>
    %cst = arith.constant dense<0.000000e+00> : vector<512x32xf32>
    %2 = tpu.matmul %0, %1, %cst {dimension_numbers = #tpu.dot_dimension_numbers<[1], [0], [0], [1], [0, 0, 1, 1], [], []>} : vector<512x32xbf16>, vector<32x32xbf16>, vector<512x32xf32> -> vector<512x32xf32>
    %c0_3 = arith.constant 0 : index
    %c0_4 = arith.constant 0 : index
    %3 = vector.load %arg3[%c0_3, %c0_4] : memref<1x32xf32, #tpu.memory_space<vmem>>, vector<1x32xf32>
    %4 = vector.broadcast %3 : vector<1x32xf32> to vector<512x32xf32>
    %5 = arith.addf %2, %4 : vector<512x32xf32>
    %cst_5 = arith.constant 0.000000e+00 : f32
    %6 = vector.broadcast %cst_5 : f32 to vector<512x32xf32>
    %7 = arith.maximumf %5, %6 : vector<512x32xf32>
    %8 = arith.truncf %7 : vector<512x32xf32> to vector<512x32xbf16>
    %c0_6 = arith.constant 0 : index
    %c0_7 = arith.constant 0 : index
    %9 = vector.load %arg4[%c0_6, %c0_7] : memref<32x32xbf16, #tpu.memory_space<vmem>>, vector<32x32xbf16>
    %cst_8 = arith.constant dense<0.000000e+00> : vector<512x32xf32>
    %10 = tpu.matmul %8, %9, %cst_8 {dimension_numbers = #tpu.dot_dimension_numbers<[1], [0], [0], [1], [0, 0, 1, 1], [], []>} : vector<512x32xbf16>, vector<32x32xbf16>, vector<512x32xf32> -> vector<512x32xf32>
    %c0_9 = arith.constant 0 : index
    %c0_10 = arith.constant 0 : index
    %11 = vector.load %arg5[%c0_9, %c0_10] : memref<1x32xf32, #tpu.memory_space<vmem>>, vector<1x32xf32>
    %12 = vector.broadcast %11 : vector<1x32xf32> to vector<512x32xf32>
    %13 = arith.addf %10, %12 : vector<512x32xf32>
    %cst_11 = arith.constant 0.000000e+00 : f32
    %14 = vector.broadcast %cst_11 : f32 to vector<512x32xf32>
    %15 = arith.maximumf %13, %14 : vector<512x32xf32>
    %16 = arith.truncf %15 : vector<512x32xf32> to vector<512x32xbf16>
    %c0_12 = arith.constant 0 : index
    %c0_13 = arith.constant 0 : index
    %17 = vector.load %arg6[%c0_12, %c0_13] : memref<32x16xbf16, #tpu.memory_space<vmem>>, vector<32x16xbf16>
    %cst_14 = arith.constant dense<0.000000e+00> : vector<512x16xf32>
    %18 = tpu.matmul %16, %17, %cst_14 {dimension_numbers = #tpu.dot_dimension_numbers<[1], [0], [0], [1], [0, 0, 1, 1], [], []>} : vector<512x32xbf16>, vector<32x16xbf16>, vector<512x16xf32> -> vector<512x16xf32>
    %c0_15 = arith.constant 0 : index
    %c0_16 = arith.constant 0 : index
    %19 = vector.load %arg7[%c0_15, %c0_16] : memref<1x16xf32, #tpu.memory_space<vmem>>, vector<1x16xf32>
    %20 = vector.broadcast %19 : vector<1x16xf32> to vector<512x16xf32>
    %21 = arith.addf %18, %20 : vector<512x16xf32>
    %c0_17 = arith.constant 0 : index
    %c0_18 = arith.constant 0 : index
    %22 = vector.load %arg8[%c0_17, %c0_18] : memref<512x16xf32, #tpu.memory_space<vmem>>, vector<512x16xf32>
    tpu.vector_store %arg8[%c0_17, %c0_18], %21 {strides = array<i32>} : memref<512x16xf32, #tpu.memory_space<vmem>>, vector<512x16xf32>,
    return
  }
  func.func @transform_0(%arg0: i32) -> (i32, i32) {
    %c0_i32 = arith.constant 0 : i32
    %c0_i32_0 = arith.constant 0 : i32
    return %arg0, %c0_i32 : i32, i32
  }
  func.func @transform_1(%arg0: i32) -> (i32, i32) {
    %c0_i32 = arith.constant 0 : i32
    %c0_i32_0 = arith.constant 0 : i32
    %c0_i32_1 = arith.constant 0 : i32
    return %c0_i32, %c0_i32_0 : i32, i32
  }
  func.func @transform_2(%arg0: i32) -> (i32, i32) {
    %c0_i32 = arith.constant 0 : i32
    %c0_i32_0 = arith.constant 0 : i32
    %c0_i32_1 = arith.constant 0 : i32
    return %c0_i32, %c0_i32_0 : i32, i32
  }
  func.func @transform_3(%arg0: i32) -> (i32, i32) {
    %c0_i32 = arith.constant 0 : i32
    %c0_i32_0 = arith.constant 0 : i32
    %c0_i32_1 = arith.constant 0 : i32
    return %c0_i32, %c0_i32_0 : i32, i32
  }
  func.func @transform_4(%arg0: i32) -> (i32, i32) {
    %c0_i32 = arith.constant 0 : i32
    %c0_i32_0 = arith.constant 0 : i32
    %c0_i32_1 = arith.constant 0 : i32
    return %c0_i32, %c0_i32_0 : i32, i32
  }
  func.func @transform_5(%arg0: i32) -> (i32, i32) {
    %c0_i32 = arith.constant 0 : i32
    %c0_i32_0 = arith.constant 0 : i32
    %c0_i32_1 = arith.constant 0 : i32
    return %c0_i32, %c0_i32_0 : i32, i32
  }
  func.func @transform_6(%arg0: i32) -> (i32, i32) {
    %c0_i32 = arith.constant 0 : i32
    %c0_i32_0 = arith.constant 0 : i32
    %c0_i32_1 = arith.constant 0 : i32
    return %c0_i32, %c0_i32_0 : i32, i32
  }
  func.func @transform_7(%arg0: i32) -> (i32, i32) {
    %c0_i32 = arith.constant 0 : i32
    %c0_i32_0 = arith.constant 0 : i32
    return %arg0, %c0_i32 : i32, i32
  }
}

</mosaic_0001>

<llo_original>
// kernel: edge_model_forward.1
$region0: #{edge_model_forward.1}
  #allocation0 [shape = 'u32[]', space=smem, size = 0x4, offset = 0x4, fixed_abs, tag = 'smem constant byte address 0x4 - core index']
  #allocation1 [shape = 'u32[72,128]{1,0:T(1,128)}', space=vmem, size = 0x9000, scoped, tag = 'internal scratch']
  %s0 = inlined_call_operand.vmem [shape: bf16[1024,32], index: 0, kind: input, shape index: {}]
  %s1 = inlined_call_operand.vmem [shape: bf16[32,32], index: 1, kind: input, shape index: {}]
  %s2 = inlined_call_operand.vmem [shape: f32[1,32], index: 2, kind: input, shape index: {}]
  %s3 = inlined_call_operand.vmem [shape: bf16[32,32], index: 3, kind: input, shape index: {}]
  %s4 = inlined_call_operand.vmem [shape: f32[1,32], index: 4, kind: input, shape index: {}]
  %s5 = inlined_call_operand.vmem [shape: bf16[32,16], index: 5, kind: input, shape index: {}]
  %s6 = inlined_call_operand.vmem [shape: f32[1,16], index: 6, kind: input, shape index: {}]
  %s7 = inlined_call_operand.vmem [shape: f32[1024,16], index: 7, kind: output, shape index: {}]
  %s8 = sld [smem:[#allocation0]]
  $region61: #{edge_model_forward.1} parent=0
    _
  %s10 = ssub.s32 1, %s8
  %s11 = scalar_select 0, %s10, %s8
  loop: start=0, step=1, limit=4
  $region2: #{edge_model_forward.1} parent=0 // loop_pre_header
    _
  $region3: #{edge_model_forward.1} parent=0 // loop_header
    %s13 = sphi 0, %s17
    %p14 = scmp.ge.s32.totalorder %s13, 4
    %s23 = sphi 0, %s25
    %s26 = sphi 0, %s23
    %s27 = sphi 0, %s26
    %s43 = sphi 0, %s27
    %s47 = sphi 0, %s47
    %s49 = sphi 0, %s47
    %s50 = sphi 0, %s49
    %s64 = sphi 0, %s50
    %s68 = sphi 0, %s68
    %s70 = sphi 0, %s68
    %s71 = sphi 0, %s70
    %s85 = sphi 0, %s71
    %s89 = sphi 0, %s89
    %s91 = sphi 0, %s89
    %s92 = sphi 0, %s91
    %s106 = sphi 0, %s92
    %s110 = sphi 0, %s110
    %s112 = sphi 0, %s110
    %s113 = sphi 0, %s112
    %s127 = sphi 0, %s113
    %s131 = sphi 0, %s131
    %s133 = sphi 0, %s131
    %s134 = sphi 0, %s133
    %s148 = sphi 0, %s134
    %s152 = sphi 0, %s152
    %s154 = sphi 0, %s152
    %s155 = sphi 0, %s154
    %s169 = sphi 0, %s155
    %s175 = sphi 0, %s177
    %s178 = sphi 0, %s175
    %s179 = sphi 0, %s178
    %s195 = sphi 0, %s179
  $region4: #{edge_model_forward.1} parent=0 // loop_header_branch
    %16 = sbr.rel (%p14) target = $region8
  $region5: #{edge_model_forward.1} parent=0 // loop_body
    %s18 = ssub.s32 %s13, 1
    %s19 = ssub.s32 %s13, 2
    %s20 = sadd.s32 %s13, 1
    %s21 = ssub.s32 %s13, %s20
    %p22 = scmp.eq.s32.totalorder %s21, 0
    %s24 = sadd.s32 %s23, 1
    %s25 = scalar_select %p22, %s23, %s24
    %p28 = pneg %p22
    %p29 = scmp.eq.s32.totalorder %s13, 1
    %p30 = por %p28, %p29
    %p31 = scmp.ne.s32.totalorder %s23, %s26
    %p32 = scmp.eq.s32.totalorder %s13, 0
    %p33 = por %p31, %p32
    %p34 = scmp.ne.s32.totalorder %s23, %s26
    %p35 = scmp.eq.s32.totalorder %s18, 1
    %p36 = por %p34, %p35
    %p37 = scmp.ne.s32.totalorder %s26, %s27
    %p38 = scmp.eq.s32.totalorder %s18, 0
    %p39 = por %p37, %p38
    %p40 = scmp.ne.s32.totalorder %s26, %s27
    %p41 = scmp.eq.s32.totalorder %s19, 1
    %p42 = por %p40, %p41
    %p44 = scmp.ne.s32.totalorder %s27, %s43
    %p45 = scmp.eq.s32.totalorder %s19, 0
    %p46 = por %p44, %p45
    %s48 = sadd.s32 %s47, 1
    %p51 = scmp.eq.s32.totalorder %s13, 1
    %p52 = scmp.ne.s32.totalorder %s47, %s49
    %p53 = scmp.eq.s32.totalorder %s13, 0
    %p54 = por %p52, %p53
    %p55 = scmp.ne.s32.totalorder %s47, %s49
    %p56 = scmp.eq.s32.totalorder %s18, 1
    %p57 = por %p55, %p56
    %p58 = scmp.ne.s32.totalorder %s49, %s50
    %p59 = scmp.eq.s32.totalorder %s18, 0
    %p60 = por %p58, %p59
    %p61 = scmp.ne.s32.totalorder %s49, %s50
    %p62 = scmp.eq.s32.totalorder %s19, 1
    %p63 = por %p61, %p62
    %p65 = scmp.ne.s32.totalorder %s50, %s64
    %p66 = scmp.eq.s32.totalorder %s19, 0
    %p67 = por %p65, %p66
    %s69 = sadd.s32 %s68, 1
    %p72 = scmp.eq.s32.totalorder %s13, 1
    %p73 = scmp.ne.s32.totalorder %s68, %s70
    %p74 = scmp.eq.s32.totalorder %s13, 0
    %p75 = por %p73, %p74
    %p76 = scmp.ne.s32.totalorder %s68, %s70
    %p77 = scmp.eq.s32.totalorder %s18, 1
    %p78 = por %p76, %p77
    %p79 = scmp.ne.s32.totalorder %s70, %s71
    %p80 = scmp.eq.s32.totalorder %s18, 0
    %p81 = por %p79, %p80
    %p82 = scmp.ne.s32.totalorder %s70, %s71
    %p83 = scmp.eq.s32.totalorder %s19, 1
    %p84 = por %p82, %p83
    %p86 = scmp.ne.s32.totalorder %s71, %s85
    %p87 = scmp.eq.s32.totalorder %s19, 0
    %p88 = por %p86, %p87
    %s90 = sadd.s32 %s89, 1
    %p93 = scmp.eq.s32.totalorder %s13, 1
    %p94 = scmp.ne.s32.totalorder %s89, %s91
    %p95 = scmp.eq.s32.totalorder %s13, 0
    %p96 = por %p94, %p95
    %p97 = scmp.ne.s32.totalorder %s89, %s91
    %p98 = scmp.eq.s32.totalorder %s18, 1
    %p99 = por %p97, %p98
    %p100 = scmp.ne.s32.totalorder %s91, %s92
    %p101 = scmp.eq.s32.totalorder %s18, 0
    %p102 = por %p100, %p101
    %p103 = scmp.ne.s32.totalorder %s91, %s92
    %p104 = scmp.eq.s32.totalorder %s19, 1
    %p105 = por %p103, %p104
    %p107 = scmp.ne.s32.totalorder %s92, %s106
    %p108 = scmp.eq.s32.totalorder %s19, 0
    %p109 = por %p107, %p108
    %s111 = sadd.s32 %s110, 1
    %p114 = scmp.eq.s32.totalorder %s13, 1
    %p115 = scmp.ne.s32.totalorder %s110, %s112
    %p116 = scmp.eq.s32.totalorder %s13, 0
    %p117 = por %p115, %p116
    %p118 = scmp.ne.s32.totalorder %s110, %s112
    %p119 = scmp.eq.s32.totalorder %s18, 1
    %p120 = por %p118, %p119
    %p121 = scmp.ne.s32.totalorder %s112, %s113
    %p122 = scmp.eq.s32.totalorder %s18, 0
    %p123 = por %p121, %p122
    %p124 = scmp.ne.s32.totalorder %s112, %s113
    %p125 = scmp.eq.s32.totalorder %s19, 1
    %p126 = por %p124, %p125
    %p128 = scmp.ne.s32.totalorder %s113, %s127
    %p129 = scmp.eq.s32.totalorder %s19, 0
    %p130 = por %p128, %p129
    %s132 = sadd.s32 %s131, 1
    %p135 = scmp.eq.s32.totalorder %s13, 1
    %p136 = scmp.ne.s32.totalorder %s131, %s133
    %p137 = scmp.eq.s32.totalorder %s13, 0
    %p138 = por %p136, %p137
    %p139 = scmp.ne.s32.totalorder %s131, %s133
    %p140 = scmp.eq.s32.totalorder %s18, 1
    %p141 = por %p139, %p140
    %p142 = scmp.ne.s32.totalorder %s133, %s134
    %p143 = scmp.eq.s32.totalorder %s18, 0
    %p144 = por %p142, %p143
    %p145 = scmp.ne.s32.totalorder %s133, %s134
    %p146 = scmp.eq.s32.totalorder %s19, 1
    %p147 = por %p145, %p146
    %p149 = scmp.ne.s32.totalorder %s134, %s148
    %p150 = scmp.eq.s32.totalorder %s19, 0
    %p151 = por %p149, %p150
    %s153 = sadd.s32 %s152, 1
    %p156 = scmp.eq.s32.totalorder %s13, 1
    %p157 = scmp.ne.s32.totalorder %s152, %s154
    %p158 = scmp.eq.s32.totalorder %s13, 0
    %p159 = por %p157, %p158
    %p160 = scmp.ne.s32.totalorder %s152, %s154
    %p161 = scmp.eq.s32.totalorder %s18, 1
    %p162 = por %p160, %p161
    %p163 = scmp.ne.s32.totalorder %s154, %s155
    %p164 = scmp.eq.s32.totalorder %s18, 0
    %p165 = por %p163, %p164
    %p166 = scmp.ne.s32.totalorder %s154, %s155
    %p167 = scmp.eq.s32.totalorder %s19, 1
    %p168 = por %p166, %p167
    %p170 = scmp.ne.s32.totalorder %s155, %s169
    %p171 = scmp.eq.s32.totalorder %s19, 0
    %p172 = por %p170, %p171
    %s173 = ssub.s32 %s13, %s20
    %p174 = scmp.eq.s32.totalorder %s173, 0
    %s176 = sadd.s32 %s175, 1
    %s177 = scalar_select %p174, %s175, %s176
    %p180 = pneg %p174
    %p181 = scmp.eq.s32.totalorder %s13, 1
    %p182 = por %p180, %p181
    %p183 = scmp.ne.s32.totalorder %s175, %s178
    %p184 = scmp.eq.s32.totalorder %s13, 0
    %p185 = por %p183, %p184
    %p186 = scmp.ne.s32.totalorder %s175, %s178
    %p187 = scmp.eq.s32.totalorder %s18, 1
    %p188 = por %p186, %p187
    %p189 = scmp.ne.s32.totalorder %s178, %s179
    %p190 = scmp.eq.s32.totalorder %s18, 0
    %p191 = por %p189, %p190
    %p192 = scmp.ne.s32.totalorder %s178, %s179
    %p193 = scmp.eq.s32.totalorder %s19, 1
    %p194 = por %p192, %p193
    %p196 = scmp.ne.s32.totalorder %s179, %s195
    %p197 = scmp.eq.s32.totalorder %s19, 0
    %p198 = por %p196, %p197
    %p199 = scmp.le.s32.totalorder 1, %s13
    %p200 = scmp.lt.s32.totalorder %s13, 3
    %p201 = pnand %p199, %p200
    %p202 = pneg %p201
    // Predicated region
    $region9: #{edge_model_forward.1} parent=5 // pred_check
      _
    $region10: #{edge_model_forward.1} parent=5 // pred_check_branch
      %204 = sbr.rel (%p201) target = $region12
    $region11: #{edge_model_forward.1} parent=5 // pred_region
      %s205 = ssub.s32 %s13, 1
      // Predicated region
      $region13: #{edge_model_forward.1} parent=11 // pred_check
        %p206 = pneg %p60
      $region14: #{edge_model_forward.1} parent=11 // pred_check_branch
        %208 = sbr.rel (%p206) target = $region16
      $region15: #{edge_model_forward.1} parent=11 // pred_region
        _
      $region16: #{edge_model_forward.1} parent=11 // pred_fallthru
        _
      // Predicated region
      $region17: #{edge_model_forward.1} parent=11 // pred_check
        %p209 = pneg %p81
      $region18: #{edge_model_forward.1} parent=11 // pred_check_branch
        %211 = sbr.rel (%p209) target = $region20
      $region19: #{edge_model_forward.1} parent=11 // pred_region
        _
      $region20: #{edge_model_forward.1} parent=11 // pred_fallthru
        _
      // Predicated region
      $region21: #{edge_model_forward.1} parent=11 // pred_check
        %p212 = pneg %p102
      $region22: #{edge_model_forward.1} parent=11 // pred_check_branch
        %214 = sbr.rel (%p212) target = $region24
      $region23: #{edge_model_forward.1} parent=11 // pred_region
        _
      $region24: #{edge_model_forward.1} parent=11 // pred_fallthru
        _
      // Predicated region
      $region25: #{edge_model_forward.1} parent=11 // pred_check
        %p215 = pneg %p123
      $region26: #{edge_model_forward.1} parent=11 // pred_check_branch
        %217 = sbr.rel (%p215) target = $region28
      $region27: #{edge_model_forward.1} parent=11 // pred_region
        _
      $region28: #{edge_model_forward.1} parent=11 // pred_fallthru
        _
      // Predicated region
      $region29: #{edge_model_forward.1} parent=11 // pred_check
        %p218 = pneg %p144
      $region30: #{edge_model_forward.1} parent=11 // pred_check_branch
        %220 = sbr.rel (%p218) target = $region32
      $region31: #{edge_model_forward.1} parent=11 // pred_region
        _
      $region32: #{edge_model_forward.1} parent=11 // pred_fallthru
        _
      // Predicated region
      $region33: #{edge_model_forward.1} parent=11 // pred_check
        %p221 = pneg %p165
      $region34: #{edge_model_forward.1} parent=11 // pred_check_branch
        %223 = sbr.rel (%p221) target = $region36
      $region35: #{edge_model_forward.1} parent=11 // pred_region
        _
      $region36: #{edge_model_forward.1} parent=11 // pred_fallthru
        _
    $region12: #{edge_model_forward.1} parent=5 // pred_fallthru
      _
    %p224 = scmp.lt.s32.totalorder %s13, 2
    // Predicated region
    $region37: #{edge_model_forward.1} parent=5 // pred_check
      %p225 = pneg %p224
    $region38: #{edge_model_forward.1} parent=5 // pred_check_branch
      %227 = sbr.rel (%p225) target = $region40
    $region39: #{edge_model_forward.1} parent=5 // pred_region
      // Predicated region
      $region41: #{edge_model_forward.1} parent=39 // pred_check
        %p228 = pneg %p33
      $region42: #{edge_model_forward.1} parent=39 // pred_check_branch
        %230 = sbr.rel (%p228) target = $region44
      $region43: #{edge_model_forward.1} parent=39 // pred_region
        %s231 = smul.u32 64, %s13
        %p232 = scmp.lt.s32.totalorder %s231, 127
        %s233 = scalar_select %p232, %s231, 127
        %s234 = smul.addr %s233, 4
        %s235 = scalar_lea.vmem %s0, %s234
        %s236 = smul.u32 64, %s13
      $region44: #{edge_model_forward.1} parent=39 // pred_fallthru
        _
    $region40: #{edge_model_forward.1} parent=5 // pred_fallthru
      _
    %p237 = scmp.le.s32.totalorder 1, %s13
    %p238 = scmp.lt.s32.totalorder %s13, 3
    %p239 = pnand %p237, %p238
    %p240 = pneg %p239
    // Predicated region
    $region45: #{edge_model_forward.1} parent=5 // pred_check
      _
    $region46: #{edge_model_forward.1} parent=5 // pred_check_branch
      %242 = sbr.rel (%p239) target = $region48
    $region47: #{edge_model_forward.1} parent=5 // pred_region
      %s243 = ssub.s32 %s13, 1
      %s244 = smul.u32 64, %s18
      %p245 = scmp.lt.s32.totalorder %s244, 127
      %s246 = scalar_select %p245, %s244, 127
      %s247 = smul.addr %s246, 4
      %s248 = scalar_lea.vmem %s0, %s247
      %p249 = pneg %p39
      %p250 = pneg %p36
      %p251 = pneg %p60
      %p252 = pneg %p57
      %p253 = pneg %p81
      %p254 = pneg %p78
      %p255 = pneg %p102
      %p256 = pneg %p99
      %p257 = pneg %p123
      %p258 = pneg %p120
      %p259 = pneg %p144
      %p260 = pneg %p141
      %p261 = pneg %p165
      %p262 = pneg %p162
      %p263 = pneg %p191
      %p264 = pneg %p188
      %s265 = smul.u32 64, %s18
      %p266 = scmp.lt.s32.totalorder %s265, 127
      %s267 = scalar_select %p266, %s265, 127
      %s268 = smul.addr %s267, 8
      %s269 = scalar_lea.vmem %s7, %s268
      %s270 = smul.u32 64, %s18
      %p271 = scmp.lt.s32.totalorder %s270, 127
      %s272 = scalar_select %p271, %s270, 127
      %s273 = smul.addr %s272, 4
      %s274 = scalar_lea.vmem %s0, %s273
      %s275 = smul.u32 64, %s18
      %s276 = smul.u32 64, %s18
      %p277 = scmp.lt.s32.totalorder %s276, 127
      %s278 = scalar_select %p277, %s276, 127
      %s279 = smul.addr %s278, 8
      %s280 = scalar_lea.vmem %s7, %s279
      %s281 = smul.u32 64, %s18
      %v283 = vld [vmem:[%s274] sm:$0xf]
      %v284 = vld [vmem:[%s274 + $0x4] sm:$0xf]
      %v285 = vld [vmem:[%s274 + $0x8] sm:$0xf]
      %v286 = vld [vmem:[%s274 + $0xc] sm:$0xf]
      %v287 = vld [vmem:[%s274 + $0x10] sm:$0xf]
      %v288 = vld [vmem:[%s274 + $0x14] sm:$0xf]
      %v289 = vld [vmem:[%s274 + $0x18] sm:$0xf]
      %v290 = vld [vmem:[%s274 + $0x1c] sm:$0xf]
      %v291 = vld [vmem:[%s274 + $0x20] sm:$0xf]
      %v292 = vld [vmem:[%s274 + $0x24] sm:$0xf]
      %v293 = vld [vmem:[%s274 + $0x28] sm:$0xf]
      %v294 = vld [vmem:[%s274 + $0x2c] sm:$0xf]
      %v295 = vld [vmem:[%s274 + $0x30] sm:$0xf]
      %v296 = vld [vmem:[%s274 + $0x34] sm:$0xf]
      %v297 = vld [vmem:[%s274 + $0x38] sm:$0xf]
      %v298 = vld [vmem:[%s274 + $0x3c] sm:$0xf]
      %v299 = vld [vmem:[%s274 + $0x40] sm:$0xf]
      %v300 = vld [vmem:[%s274 + $0x44] sm:$0xf]
      %v301 = vld [vmem:[%s274 + $0x48] sm:$0xf]
      %v302 = vld [vmem:[%s274 + $0x4c] sm:$0xf]
      %v303 = vld [vmem:[%s274 + $0x50] sm:$0xf]
      %v304 = vld [vmem:[%s274 + $0x54] sm:$0xf]
      %v305 = vld [vmem:[%s274 + $0x58] sm:$0xf]
      %v306 = vld [vmem:[%s274 + $0x5c] sm:$0xf]
      %v307 = vld [vmem:[%s274 + $0x60] sm:$0xf]
      %v308 = vld [vmem:[%s274 + $0x64] sm:$0xf]
      %v309 = vld [vmem:[%s274 + $0x68] sm:$0xf]
      %v310 = vld [vmem:[%s274 + $0x6c] sm:$0xf]
      %v311 = vld [vmem:[%s274 + $0x70] sm:$0xf]
      %v312 = vld [vmem:[%s274 + $0x74] sm:$0xf]
      %v313 = vld [vmem:[%s274 + $0x78] sm:$0xf]
      %v314 = vld [vmem:[%s274 + $0x7c] sm:$0xf]
      %v315 = vld [vmem:[%s274 + $0x80] sm:$0xf]
      %v316 = vld [vmem:[%s274 + $0x84] sm:$0xf]
      %v317 = vld [vmem:[%s274 + $0x88] sm:$0xf]
      %v318 = vld [vmem:[%s274 + $0x8c] sm:$0xf]
      %v319 = vld [vmem:[%s274 + $0x90] sm:$0xf]
      %v320 = vld [vmem:[%s274 + $0x94] sm:$0xf]
      %v321 = vld [vmem:[%s274 + $0x98] sm:$0xf]
      %v322 = vld [vmem:[%s274 + $0x9c] sm:$0xf]
      %v323 = vld [vmem:[%s274 + $0xa0] sm:$0xf]
      %v324 = vld [vmem:[%s274 + $0xa4] sm:$0xf]
      %v325 = vld [vmem:[%s274 + $0xa8] sm:$0xf]
      %v326 = vld [vmem:[%s274 + $0xac] sm:$0xf]
      %v327 = vld [vmem:[%s274 + $0xb0] sm:$0xf]
      %v328 = vld [vmem:[%s274 + $0xb4] sm:$0xf]
      %v329 = vld [vmem:[%s274 + $0xb8] sm:$0xf]
      %v330 = vld [vmem:[%s274 + $0xbc] sm:$0xf]
      %v331 = vld [vmem:[%s274 + $0xc0] sm:$0xf]
      %v332 = vld [vmem:[%s274 + $0xc4] sm:$0xf]
      %v333 = vld [vmem:[%s274 + $0xc8] sm:$0xf]
      %v334 = vld [vmem:[%s274 + $0xcc] sm:$0xf]
      %v335 = vld [vmem:[%s274 + $0xd0] sm:$0xf]
      %v336 = vld [vmem:[%s274 + $0xd4] sm:$0xf]
      %v337 = vld [vmem:[%s274 + $0xd8] sm:$0xf]
      %v338 = vld [vmem:[%s274 + $0xdc] sm:$0xf]
      %v339 = vld [vmem:[%s274 + $0xe0] sm:$0xf]
      %v340 = vld [vmem:[%s274 + $0xe4] sm:$0xf]
      %v341 = vld [vmem:[%s274 + $0xe8] sm:$0xf]
      %v342 = vld [vmem:[%s274 + $0xec] sm:$0xf]
      %v343 = vld [vmem:[%s274 + $0xf0] sm:$0xf]
      %v344 = vld [vmem:[%s274 + $0xf4] sm:$0xf]
      %v345 = vld [vmem:[%s274 + $0xf8] sm:$0xf]
      %v346 = vld [vmem:[%s274 + $0xfc] sm:$0xf]
      %v347 = vld [vmem:[%s1] sm:$0xf]
      %v348 = vld [vmem:[%s1 + $0x4] sm:$0xf]
      %v349 = vld [vmem:[%s1 + $0x8] sm:$0xf]
      %v350 = vld [vmem:[%s1 + $0xc] sm:$0xf]
      %v351 = vld [vmem:[%s2] sm:$0x1]
      %v353 = vperm.slane %v351, 0
      %v419 = vunpack.c.l.b16 %v283
      %v420 = vunpack.c.l.b16 %v284
      %v421 = vunpack.c.l.b16 %v285
      %v422 = vunpack.c.l.b16 %v286
      %v423 = vunpack.c.l.b16 %v287
      %v424 = vunpack.c.l.b16 %v288
      %v425 = vunpack.c.l.b16 %v289
      %v426 = vunpack.c.l.b16 %v290
      %v427 = vunpack.c.l.b16 %v291
      %v428 = vunpack.c.l.b16 %v292
      %v429 = vunpack.c.l.b16 %v293
      %v430 = vunpack.c.l.b16 %v294
      %v431 = vunpack.c.l.b16 %v295
      %v432 = vunpack.c.l.b16 %v296
      %v433 = vunpack.c.l.b16 %v297
      %v434 = vunpack.c.l.b16 %v298
      %v435 = vunpack.c.l.b16 %v299
      %v436 = vunpack.c.l.b16 %v300
      %v437 = vunpack.c.l.b16 %v301
      %v438 = vunpack.c.l.b16 %v302
      %v439 = vunpack.c.l.b16 %v303
      %v440 = vunpack.c.l.b16 %v304
      %v441 = vunpack.c.l.b16 %v305
      %v442 = vunpack.c.l.b16 %v306
      %v443 = vunpack.c.l.b16 %v307
      %v444 = vunpack.c.l.b16 %v308
      %v445 = vunpack.c.l.b16 %v309
      %v446 = vunpack.c.l.b16 %v310
      %v447 = vunpack.c.l.b16 %v311
      %v448 = vunpack.c.l.b16 %v312
      %v449 = vunpack.c.l.b16 %v313
      %v450 = vunpack.c.l.b16 %v314
      %v451 = vunpack.c.l.b16 %v315
      %v452 = vunpack.c.l.b16 %v316
      %v453 = vunpack.c.l.b16 %v317
      %v454 = vunpack.c.l.b16 %v318
      %v455 = vunpack.c.l.b16 %v319
      %v456 = vunpack.c.l.b16 %v320
      %v457 = vunpack.c.l.b16 %v321
      %v458 = vunpack.c.l.b16 %v322
      %v459 = vunpack.c.l.b16 %v323
      %v460 = vunpack.c.l.b16 %v324
      %v461 = vunpack.c.l.b16 %v325
      %v462 = vunpack.c.l.b16 %v326
      %v463 = vunpack.c.l.b16 %v327
      %v464 = vunpack.c.l.b16 %v328
      %v465 = vunpack.c.l.b16 %v329
      %v466 = vunpack.c.l.b16 %v330
      %v467 = vunpack.c.l.b16 %v331
      %v468 = vunpack.c.l.b16 %v332
      %v469 = vunpack.c.l.b16 %v333
      %v470 = vunpack.c.l.b16 %v334
      %v471 = vunpack.c.l.b16 %v335
      %v472 = vunpack.c.l.b16 %v336
      %v473 = vunpack.c.l.b16 %v337
      %v474 = vunpack.c.l.b16 %v338
      %v475 = vunpack.c.l.b16 %v339
      %v476 = vunpack.c.l.b16 %v340
      %v477 = vunpack.c.l.b16 %v341
      %v478 = vunpack.c.l.b16 %v342
      %v479 = vunpack.c.l.b16 %v343
      %v480 = vunpack.c.l.b16 %v344
      %v481 = vunpack.c.l.b16 %v345
      %v482 = vunpack.c.l.b16 %v346
      %v483 = vpack.c.b16 %v420, %v419
      %v484 = vpack.c.b16 %v422, %v421
      %v485 = vpack.c.b16 %v424, %v423
      %v486 = vpack.c.b16 %v426, %v425
      %v487 = vpack.c.b16 %v428, %v427
      %v488 = vpack.c.b16 %v430, %v429
      %v489 = vpack.c.b16 %v432, %v431
      %v490 = vpack.c.b16 %v434, %v433
      %v491 = vpack.c.b16 %v436, %v435
      %v492 = vpack.c.b16 %v438, %v437
      %v493 = vpack.c.b16 %v440, %v439
      %v494 = vpack.c.b16 %v442, %v441
      %v495 = vpack.c.b16 %v444, %v443
      %v496 = vpack.c.b16 %v446, %v445
      %v497 = vpack.c.b16 %v448, %v447
      %v498 = vpack.c.b16 %v450, %v449
      %v499 = vpack.c.b16 %v452, %v451
      %v500 = vpack.c.b16 %v454, %v453
      %v501 = vpack.c.b16 %v456, %v455
      %v502 = vpack.c.b16 %v458, %v457
      %v503 = vpack.c.b16 %v460, %v459
      %v504 = vpack.c.b16 %v462, %v461
      %v505 = vpack.c.b16 %v464, %v463
      %v506 = vpack.c.b16 %v466, %v465
      %v507 = vpack.c.b16 %v468, %v467
      %v508 = vpack.c.b16 %v470, %v469
      %v509 = vpack.c.b16 %v472, %v471
      %v510 = vpack.c.b16 %v474, %v473
      %v511 = vpack.c.b16 %v476, %v475
      %v512 = vpack.c.b16 %v478, %v477
      %v513 = vpack.c.b16 %v480, %v479
      %v514 = vpack.c.b16 %v482, %v481
      %v519 = vunpack.c.l.b16 %v347
      %v520 = vunpack.c.l.b16 %v348
      %v521 = vunpack.c.l.b16 %v349
      %v522 = vunpack.c.l.b16 %v350
      %v523 = vpack.c.b16 %v520, %v519
      %v524 = vpack.c.b16 %v522, %v521
      %vm527 = vcmask 261120
      %v529 = vsel %vm527, %v483, 0
      %v532 = vsel %vm527, %v484, 0
      %v535 = vsel %vm527, %v485, 0
      %v538 = vsel %vm527, %v486, 0
      %v541 = vsel %vm527, %v487, 0
      %v544 = vsel %vm527, %v488, 0
      %v547 = vsel %vm527, %v489, 0
      %v550 = vsel %vm527, %v490, 0
      %v553 = vsel %vm527, %v491, 0
      %v556 = vsel %vm527, %v492, 0
      %v559 = vsel %vm527, %v493, 0
      %v562 = vsel %vm527, %v494, 0
      %v565 = vsel %vm527, %v495, 0
      %v568 = vsel %vm527, %v496, 0
      %v571 = vsel %vm527, %v497, 0
      %v574 = vsel %vm527, %v498, 0
      %v577 = vsel %vm527, %v499, 0
      %v580 = vsel %vm527, %v500, 0
      %v583 = vsel %vm527, %v501, 0
      %v586 = vsel %vm527, %v502, 0
      %v589 = vsel %vm527, %v503, 0
      %v592 = vsel %vm527, %v504, 0
      %v595 = vsel %vm527, %v505, 0
      %v598 = vsel %vm527, %v506, 0
      %v601 = vsel %vm527, %v507, 0
      %v604 = vsel %vm527, %v508, 0
      %v607 = vsel %vm527, %v509, 0
      %v610 = vsel %vm527, %v510, 0
      %v613 = vsel %vm527, %v511, 0
      %v616 = vsel %vm527, %v512, 0
      %v619 = vsel %vm527, %v513, 0
      %v622 = vsel %vm527, %v514, 0
      %624 = vmatpush.bf16.msra.mxu0 0
      %625 = vmatpush.bf16.msra.mxu0 0
      %626 = vmatpush.bf16.msra.mxu0 0
      %627 = vmatpush.bf16.msra.mxu0 0
      %628 = vmatpush.bf16.msra.mxu0 0
      %629 = vmatpush.bf16.msra.mxu0 0
      %630 = vmatpush.bf16.msra.mxu0 %v524
      %631 = vmatpush.bf16.msra.mxu0 %v523
      %632 = vmatmul.bf16.gmra.mxu0 %v529
      %v633 = vpop.f32.mrf.mxu0
      %v634 = vadd.f32 %v353, %v633
      %v635 = vpop.f32.mrf.mxu0
      %v636 = vadd.f32 %v353, %v635
      %637 = vmatmul.bf16.gmra.mxu0 %v532
      %v638 = vpop.f32.mrf.mxu0
      %v639 = vadd.f32 %v353, %v638
      %v640 = vpop.f32.mrf.mxu0
      %v641 = vadd.f32 %v353, %v640
      %642 = vmatmul.bf16.gmra.mxu0 %v535
      %v643 = vpop.f32.mrf.mxu0
      %v644 = vadd.f32 %v353, %v643
      %v645 = vpop.f32.mrf.mxu0
      %v646 = vadd.f32 %v353, %v645
      %647 = vmatmul.bf16.gmra.mxu0 %v538
      %v648 = vpop.f32.mrf.mxu0
      %v649 = vadd.f32 %v353, %v648
      %v650 = vpop.f32.mrf.mxu0
      %v651 = vadd.f32 %v353, %v650
      %652 = vmatmul.bf16.gmra.mxu0 %v541
      %v653 = vpop.f32.mrf.mxu0
      %v654 = vadd.f32 %v353, %v653
      %v655 = vpop.f32.mrf.mxu0
      %v656 = vadd.f32 %v353, %v655
      %657 = vmatmul.bf16.gmra.mxu0 %v544
      %v658 = vpop.f32.mrf.mxu0
      %v659 = vadd.f32 %v353, %v658
      %v660 = vpop.f32.mrf.mxu0
      %v661 = vadd.f32 %v353, %v660
      %662 = vmatmul.bf16.gmra.mxu0 %v547
      %v663 = vpop.f32.mrf.mxu0
      %v664 = vadd.f32 %v353, %v663
      %v665 = vpop.f32.mrf.mxu0
      %v666 = vadd.f32 %v353, %v665
      %667 = vmatmul.bf16.gmra.mxu0 %v550
      %v668 = vpop.f32.mrf.mxu0
      %v669 = vadd.f32 %v353, %v668
      %v670 = vpop.f32.mrf.mxu0
      %v671 = vadd.f32 %v353, %v670
      %672 = vmatmul.bf16.gmra.mxu0 %v553
      %v673 = vpop.f32.mrf.mxu0
      %v674 = vadd.f32 %v353, %v673
      %v675 = vpop.f32.mrf.mxu0
      %v676 = vadd.f32 %v353, %v675
      %677 = vmatmul.bf16.gmra.mxu0 %v556
      %v678 = vpop.f32.mrf.mxu0
      %v679 = vadd.f32 %v353, %v678
      %v680 = vpop.f32.mrf.mxu0
      %v681 = vadd.f32 %v353, %v680
      %682 = vmatmul.bf16.gmra.mxu0 %v559
      %v683 = vpop.f32.mrf.mxu0
      %v684 = vadd.f32 %v353, %v683
      %v685 = vpop.f32.mrf.mxu0
      %v686 = vadd.f32 %v353, %v685
      %687 = vmatmul.bf16.gmra.mxu0 %v562
      %v688 = vpop.f32.mrf.mxu0
      %v689 = vadd.f32 %v353, %v688
      %v690 = vpop.f32.mrf.mxu0
      %v691 = vadd.f32 %v353, %v690
      %692 = vmatmul.bf16.gmra.mxu0 %v565
      %v693 = vpop.f32.mrf.mxu0
      %v694 = vadd.f32 %v353, %v693
      %v695 = vpop.f32.mrf.mxu0
      %v696 = vadd.f32 %v353, %v695
      %697 = vmatmul.bf16.gmra.mxu0 %v568
      %v698 = vpop.f32.mrf.mxu0
      %v699 = vadd.f32 %v353, %v698
      %v700 = vpop.f32.mrf.mxu0
      %v701 = vadd.f32 %v353, %v700
      %702 = vmatmul.bf16.gmra.mxu0 %v571
      %v703 = vpop.f32.mrf.mxu0
      %v704 = vadd.f32 %v353, %v703
      %v705 = vpop.f32.mrf.mxu0
      %v706 = vadd.f32 %v353, %v705
      %707 = vmatmul.bf16.gmra.mxu0 %v574
      %v708 = vpop.f32.mrf.mxu0
      %v709 = vadd.f32 %v353, %v708
      %v710 = vpop.f32.mrf.mxu0
      %v711 = vadd.f32 %v353, %v710
      %712 = vmatmul.bf16.gmra.mxu0 %v577
      %v713 = vpop.f32.mrf.mxu0
      %v714 = vadd.f32 %v353, %v713
      %v715 = vpop.f32.mrf.mxu0
      %v716 = vadd.f32 %v353, %v715
      %717 = vmatmul.bf16.gmra.mxu0 %v580
      %v718 = vpop.f32.mrf.mxu0
      %v719 = vadd.f32 %v353, %v718
      %v720 = vpop.f32.mrf.mxu0
      %v721 = vadd.f32 %v353, %v720
      %722 = vmatmul.bf16.gmra.mxu0 %v583
      %v723 = vpop.f32.mrf.mxu0
      %v724 = vadd.f32 %v353, %v723
      %v725 = vpop.f32.mrf.mxu0
      %v726 = vadd.f32 %v353, %v725
      %727 = vmatmul.bf16.gmra.mxu0 %v586
      %v728 = vpop.f32.mrf.mxu0
      %v729 = vadd.f32 %v353, %v728
      %v730 = vpop.f32.mrf.mxu0
      %v731 = vadd.f32 %v353, %v730
      %732 = vmatmul.bf16.gmra.mxu0 %v589
      %v733 = vpop.f32.mrf.mxu0
      %v734 = vadd.f32 %v353, %v733
      %v735 = vpop.f32.mrf.mxu0
      %v736 = vadd.f32 %v353, %v735
      %737 = vmatmul.bf16.gmra.mxu0 %v592
      %v738 = vpop.f32.mrf.mxu0
      %v739 = vadd.f32 %v353, %v738
      %v740 = vpop.f32.mrf.mxu0
      %v741 = vadd.f32 %v353, %v740
      %742 = vmatmul.bf16.gmra.mxu0 %v595
      %v743 = vpop.f32.mrf.mxu0
      %v744 = vadd.f32 %v353, %v743
      %v745 = vpop.f32.mrf.mxu0
      %v746 = vadd.f32 %v353, %v745
      %747 = vmatmul.bf16.gmra.mxu0 %v598
      %v748 = vpop.f32.mrf.mxu0
      %v749 = vadd.f32 %v353, %v748
      %v750 = vpop.f32.mrf.mxu0
      %v751 = vadd.f32 %v353, %v750
      %752 = vmatmul.bf16.gmra.mxu0 %v601
      %v753 = vpop.f32.mrf.mxu0
      %v754 = vadd.f32 %v353, %v753
      %v755 = vpop.f32.mrf.mxu0
      %v756 = vadd.f32 %v353, %v755
      %757 = vmatmul.bf16.gmra.mxu0 %v604
      %v758 = vpop.f32.mrf.mxu0
      %v759 = vadd.f32 %v353, %v758
      %v760 = vpop.f32.mrf.mxu0
      %v761 = vadd.f32 %v353, %v760
      %762 = vmatmul.bf16.gmra.mxu0 %v607
      %v763 = vpop.f32.mrf.mxu0
      %v764 = vadd.f32 %v353, %v763
      %v765 = vpop.f32.mrf.mxu0
      %v766 = vadd.f32 %v353, %v765
      %767 = vmatmul.bf16.gmra.mxu0 %v610
      %v768 = vpop.f32.mrf.mxu0
      %v769 = vadd.f32 %v353, %v768
      %v770 = vpop.f32.mrf.mxu0
      %v771 = vadd.f32 %v353, %v770
      %772 = vmatmul.bf16.gmra.mxu0 %v613
      %v773 = vpop.f32.mrf.mxu0
      %v774 = vadd.f32 %v353, %v773
      %v775 = vpop.f32.mrf.mxu0
      %v776 = vadd.f32 %v353, %v775
      %777 = vmatmul.bf16.gmra.mxu0 %v616
      %v778 = vpop.f32.mrf.mxu0
      %v779 = vadd.f32 %v353, %v778
      %v780 = vpop.f32.mrf.mxu0
      %v781 = vadd.f32 %v353, %v780
      %782 = vmatmul.bf16.gmra.mxu0 %v619
      %v783 = vpop.f32.mrf.mxu0
      %v784 = vadd.f32 %v353, %v783
      %v785 = vpop.f32.mrf.mxu0
      %v786 = vadd.f32 %v353, %v785
      %787 = vmatmul.bf16.gmra.mxu0 %v622
      %v788 = vpop.f32.mrf.mxu0
      %v789 = vadd.f32 %v353, %v788
      %v790 = vpop.f32.mrf.mxu0
      %v791 = vadd.f32 %v353, %v790
      %792 = vdwg.mxu0
      %v793 = vmax.f32 %v634, 0.0
      %v794 = vmax.f32 %v636, 0.0
      %v795 = vmax.f32 %v639, 0.0
      %v796 = vmax.f32 %v641, 0.0
      %v797 = vmax.f32 %v644, 0.0
      %v798 = vmax.f32 %v646, 0.0
      %v799 = vmax.f32 %v649, 0.0
      %v800 = vmax.f32 %v651, 0.0
      %v801 = vmax.f32 %v654, 0.0
      %v802 = vmax.f32 %v656, 0.0
      %v803 = vmax.f32 %v659, 0.0
      %v804 = vmax.f32 %v661, 0.0
      %v805 = vmax.f32 %v664, 0.0
      %v806 = vmax.f32 %v666, 0.0
      %v807 = vmax.f32 %v669, 0.0
      %v808 = vmax.f32 %v671, 0.0
      %v809 = vmax.f32 %v674, 0.0
      %v810 = vmax.f32 %v676, 0.0
      %v811 = vmax.f32 %v679, 0.0
      %v812 = vmax.f32 %v681, 0.0
      %v813 = vmax.f32 %v684, 0.0
      %v814 = vmax.f32 %v686, 0.0
      %v815 = vmax.f32 %v689, 0.0
      %v816 = vmax.f32 %v691, 0.0
      %v817 = vmax.f32 %v694, 0.0
      %v818 = vmax.f32 %v696, 0.0
      %v819 = vmax.f32 %v699, 0.0
      %v820 = vmax.f32 %v701, 0.0
      %v821 = vmax.f32 %v704, 0.0
      %v822 = vmax.f32 %v706, 0.0
      %v823 = vmax.f32 %v709, 0.0
      %v824 = vmax.f32 %v711, 0.0
      %v825 = vmax.f32 %v714, 0.0
      %v826 = vmax.f32 %v716, 0.0
      %v827 = vmax.f32 %v719, 0.0
      %v828 = vmax.f32 %v721, 0.0
      %v829 = vmax.f32 %v724, 0.0
      %v830 = vmax.f32 %v726, 0.0
      %v831 = vmax.f32 %v729, 0.0
      %v832 = vmax.f32 %v731, 0.0
      %v833 = vmax.f32 %v734, 0.0
      %v834 = vmax.f32 %v736, 0.0
      %v835 = vmax.f32 %v739, 0.0
      %v836 = vmax.f32 %v741, 0.0
      %v837 = vmax.f32 %v744, 0.0
      %v838 = vmax.f32 %v746, 0.0
      %v839 = vmax.f32 %v749, 0.0
      %v840 = vmax.f32 %v751, 0.0
      %v841 = vmax.f32 %v754, 0.0
      %v842 = vmax.f32 %v756, 0.0
      %v843 = vmax.f32 %v759, 0.0
      %v844 = vmax.f32 %v761, 0.0
      %v845 = vmax.f32 %v764, 0.0
      %v846 = vmax.f32 %v766, 0.0
      %v847 = vmax.f32 %v769, 0.0
      %v848 = vmax.f32 %v771, 0.0
      %v849 = vmax.f32 %v774, 0.0
      %v850 = vmax.f32 %v776, 0.0
      %v851 = vmax.f32 %v779, 0.0
      %v852 = vmax.f32 %v781, 0.0
      %v853 = vmax.f32 %v784, 0.0
      %v854 = vmax.f32 %v786, 0.0
      %v855 = vmax.f32 %v789, 0.0
      %v856 = vmax.f32 %v791, 0.0
      %v857 = vpack.c.bf16 %v794, %v793
      %v858 = vpack.c.bf16 %v796, %v795
      %v859 = vpack.c.bf16 %v798, %v797
      %v860 = vpack.c.bf16 %v800, %v799
      %v861 = vpack.c.bf16 %v802, %v801
      %v862 = vpack.c.bf16 %v804, %v803
      %v863 = vpack.c.bf16 %v806, %v805
      %v864 = vpack.c.bf16 %v808, %v807
      %v865 = vpack.c.bf16 %v810, %v809
      %v866 = vpack.c.bf16 %v812, %v811
      %v867 = vpack.c.bf16 %v814, %v813
      %v868 = vpack.c.bf16 %v816, %v815
      %v869 = vpack.c.bf16 %v818, %v817
      %v870 = vpack.c.bf16 %v820, %v819
      %v871 = vpack.c.bf16 %v822, %v821
      %v872 = vpack.c.bf16 %v824, %v823
      %v873 = vpack.c.bf16 %v826, %v825
      %v874 = vpack.c.bf16 %v828, %v827
      %v875 = vpack.c.bf16 %v830, %v829
      %v876 = vpack.c.bf16 %v832, %v831
      %v877 = vpack.c.bf16 %v834, %v833
      %v878 = vpack.c.bf16 %v836, %v835
      %v879 = vpack.c.bf16 %v838, %v837
      %v880 = vpack.c.bf16 %v840, %v839
      %v881 = vpack.c.bf16 %v842, %v841
      %v882 = vpack.c.bf16 %v844, %v843
      %v883 = vpack.c.bf16 %v846, %v845
      %v884 = vpack.c.bf16 %v848, %v847
      %v885 = vpack.c.bf16 %v850, %v849
      %v886 = vpack.c.bf16 %v852, %v851
      %v887 = vpack.c.bf16 %v854, %v853
      %v888 = vpack.c.bf16 %v856, %v855
      %v889 = vld [vmem:[%s3] sm:$0xf]
      %v890 = vld [vmem:[%s3 + $0x4] sm:$0xf]
      %v891 = vld [vmem:[%s3 + $0x8] sm:$0xf]
      %v892 = vld [vmem:[%s3 + $0xc] sm:$0xf]
      %v893 = vld [vmem:[%s4] sm:$0x1]
      %v895 = vperm.slane %v893, 0
      %v901 = vunpack.c.l.b16 %v889
      %v902 = vunpack.c.l.b16 %v890
      %v903 = vunpack.c.l.b16 %v891
      %v904 = vunpack.c.l.b16 %v892
      %v905 = vpack.c.b16 %v902, %v901
      %v906 = vpack.c.b16 %v904, %v903
      %v910 = vsel %vm527, %v857, 0
      %v913 = vsel %vm527, %v858, 0
      %v916 = vsel %vm527, %v859, 0
      %v919 = vsel %vm527, %v860, 0
      %v922 = vsel %vm527, %v861, 0
      %v925 = vsel %vm527, %v862, 0
      %v928 = vsel %vm527, %v863, 0
      %v931 = vsel %vm527, %v864, 0
      %v934 = vsel %vm527, %v865, 0
      %v937 = vsel %vm527, %v866, 0
      %v940 = vsel %vm527, %v867, 0
      %v943 = vsel %vm527, %v868, 0
      %v946 = vsel %vm527, %v869, 0
      %v949 = vsel %vm527, %v870, 0
      %v952 = vsel %vm527, %v871, 0
      %v955 = vsel %vm527, %v872, 0
      %v958 = vsel %vm527, %v873, 0
      %v961 = vsel %vm527, %v874, 0
      %v964 = vsel %vm527, %v875, 0
      %v967 = vsel %vm527, %v876, 0
      %v970 = vsel %vm527, %v877, 0
      %v973 = vsel %vm527, %v878, 0
      %v976 = vsel %vm527, %v879, 0
      %v979 = vsel %vm527, %v880, 0
      %v982 = vsel %vm527, %v881, 0
      %v985 = vsel %vm527, %v882, 0
      %v988 = vsel %vm527, %v883, 0
      %v991 = vsel %vm527, %v884, 0
      %v994 = vsel %vm527, %v885, 0
      %v997 = vsel %vm527, %v886, 0
      %v1000 = vsel %vm527, %v887, 0
      %v1003 = vsel %vm527, %v888, 0
      %1005 = vmatpush.bf16.msra.mxu0 0
      %1006 = vmatpush.bf16.msra.mxu0 0
      %1007 = vmatpush.bf16.msra.mxu0 0
      %1008 = vmatpush.bf16.msra.mxu0 0
      %1009 = vmatpush.bf16.msra.mxu0 0
      %1010 = vmatpush.bf16.msra.mxu0 0
      %1011 = vmatpush.bf16.msra.mxu0 %v906
      %1012 = vmatpush.bf16.msra.mxu0 %v905
      %1013 = vmatmul.bf16.gmra.mxu0 %v910
      %v1014 = vpop.f32.mrf.mxu0
      %v1015 = vadd.f32 %v895, %v1014
      %v1016 = vpop.f32.mrf.mxu0
      %v1017 = vadd.f32 %v895, %v1016
      %1018 = vmatmul.bf16.gmra.mxu0 %v913
      %v1019 = vpop.f32.mrf.mxu0
      %v1020 = vadd.f32 %v895, %v1019
      %v1021 = vpop.f32.mrf.mxu0
      %v1022 = vadd.f32 %v895, %v1021
      %1023 = vmatmul.bf16.gmra.mxu0 %v916
      %v1024 = vpop.f32.mrf.mxu0
      %v1025 = vadd.f32 %v895, %v1024
      %v1026 = vpop.f32.mrf.mxu0
      %v1027 = vadd.f32 %v895, %v1026
      %1028 = vmatmul.bf16.gmra.mxu0 %v919
      %v1029 = vpop.f32.mrf.mxu0
      %v1030 = vadd.f32 %v895, %v1029
      %v1031 = vpop.f32.mrf.mxu0
      %v1032 = vadd.f32 %v895, %v1031
      %1033 = vmatmul.bf16.gmra.mxu0 %v922
      %v1034 = vpop.f32.mrf.mxu0
      %v1035 = vadd.f32 %v895, %v1034
      %v1036 = vpop.f32.mrf.mxu0
      %v1037 = vadd.f32 %v895, %v1036
      %1038 = vmatmul.bf16.gmra.mxu0 %v925
      %v1039 = vpop.f32.mrf.mxu0
      %v1040 = vadd.f32 %v895, %v1039
      %v1041 = vpop.f32.mrf.mxu0
      %v1042 = vadd.f32 %v895, %v1041
      %1043 = vmatmul.bf16.gmra.mxu0 %v928
      %v1044 = vpop.f32.mrf.mxu0
      %v1045 = vadd.f32 %v895, %v1044
      %v1046 = vpop.f32.mrf.mxu0
      %v1047 = vadd.f32 %v895, %v1046
      %1048 = vmatmul.bf16.gmra.mxu0 %v931
      %v1049 = vpop.f32.mrf.mxu0
      %v1050 = vadd.f32 %v895, %v1049
      %v1051 = vpop.f32.mrf.mxu0
      %v1052 = vadd.f32 %v895, %v1051
      %1053 = vmatmul.bf16.gmra.mxu0 %v934
      %v1054 = vpop.f32.mrf.mxu0
      %v1055 = vadd.f32 %v895, %v1054
      %v1056 = vpop.f32.mrf.mxu0
      %v1057 = vadd.f32 %v895, %v1056
      %1058 = vmatmul.bf16.gmra.mxu0 %v937
      %v1059 = vpop.f32.mrf.mxu0
      %v1060 = vadd.f32 %v895, %v1059
      %v1061 = vpop.f32.mrf.mxu0
      %v1062 = vadd.f32 %v895, %v1061
      %1063 = vmatmul.bf16.gmra.mxu0 %v940
      %v1064 = vpop.f32.mrf.mxu0
      %v1065 = vadd.f32 %v895, %v1064
      %v1066 = vpop.f32.mrf.mxu0
      %v1067 = vadd.f32 %v895, %v1066
      %1068 = vmatmul.bf16.gmra.mxu0 %v943
      %v1069 = vpop.f32.mrf.mxu0
      %v1070 = vadd.f32 %v895, %v1069
      %v1071 = vpop.f32.mrf.mxu0
      %v1072 = vadd.f32 %v895, %v1071
      %1073 = vmatmul.bf16.gmra.mxu0 %v946
      %v1074 = vpop.f32.mrf.mxu0
      %v1075 = vadd.f32 %v895, %v1074
      %v1076 = vpop.f32.mrf.mxu0
      %v1077 = vadd.f32 %v895, %v1076
      %1078 = vmatmul.bf16.gmra.mxu0 %v949
      %v1079 = vpop.f32.mrf.mxu0
      %v1080 = vadd.f32 %v895, %v1079
      %v1081 = vpop.f32.mrf.mxu0
      %v1082 = vadd.f32 %v895, %v1081
      %1083 = vmatmul.bf16.gmra.mxu0 %v952
      %v1084 = vpop.f32.mrf.mxu0
      %v1085 = vadd.f32 %v895, %v1084
      %v1086 = vpop.f32.mrf.mxu0
      %v1087 = vadd.f32 %v895, %v1086
      %1088 = vmatmul.bf16.gmra.mxu0 %v955
      %v1089 = vpop.f32.mrf.mxu0
      %v1090 = vadd.f32 %v895, %v1089
      %v1091 = vpop.f32.mrf.mxu0
      %v1092 = vadd.f32 %v895, %v1091
      %1093 = vmatmul.bf16.gmra.mxu0 %v958
      %v1094 = vpop.f32.mrf.mxu0
      %v1095 = vadd.f32 %v895, %v1094
      %v1096 = vpop.f32.mrf.mxu0
      %v1097 = vadd.f32 %v895, %v1096
      %1098 = vmatmul.bf16.gmra.mxu0 %v961
      %v1099 = vpop.f32.mrf.mxu0
      %v1100 = vadd.f32 %v895, %v1099
      %v1101 = vpop.f32.mrf.mxu0
      %v1102 = vadd.f32 %v895, %v1101
      %1103 = vmatmul.bf16.gmra.mxu0 %v964
      %v1104 = vpop.f32.mrf.mxu0
      %v1105 = vadd.f32 %v895, %v1104
      %v1106 = vpop.f32.mrf.mxu0
      %v1107 = vadd.f32 %v895, %v1106
      %1108 = vmatmul.bf16.gmra.mxu0 %v967
      %v1109 = vpop.f32.mrf.mxu0
      %v1110 = vadd.f32 %v895, %v1109
      %v1111 = vpop.f32.mrf.mxu0
      %v1112 = vadd.f32 %v895, %v1111
      %1113 = vmatmul.bf16.gmra.mxu0 %v970
      %v1114 = vpop.f32.mrf.mxu0
      %v1115 = vadd.f32 %v895, %v1114
      %v1116 = vpop.f32.mrf.mxu0
      %v1117 = vadd.f32 %v895, %v1116
      %1118 = vmatmul.bf16.gmra.mxu0 %v973
      %v1119 = vpop.f32.mrf.mxu0
      %v1120 = vadd.f32 %v895, %v1119
      %v1121 = vpop.f32.mrf.mxu0
      %v1122 = vadd.f32 %v895, %v1121
      %1123 = vmatmul.bf16.gmra.mxu0 %v976
      %v1124 = vpop.f32.mrf.mxu0
      %v1125 = vadd.f32 %v895, %v1124
      %v1126 = vpop.f32.mrf.mxu0
      %v1127 = vadd.f32 %v895, %v1126
      %1128 = vmatmul.bf16.gmra.mxu0 %v979
      %v1129 = vpop.f32.mrf.mxu0
      %v1130 = vadd.f32 %v895, %v1129
      %v1131 = vpop.f32.mrf.mxu0
      %v1132 = vadd.f32 %v895, %v1131
      %1133 = vmatmul.bf16.gmra.mxu0 %v982
      %v1134 = vpop.f32.mrf.mxu0
      %v1135 = vadd.f32 %v895, %v1134
      %v1136 = vpop.f32.mrf.mxu0
      %v1137 = vadd.f32 %v895, %v1136
      %1138 = vmatmul.bf16.gmra.mxu0 %v985
      %v1139 = vpop.f32.mrf.mxu0
      %v1140 = vadd.f32 %v895, %v1139
      %v1141 = vpop.f32.mrf.mxu0
      %v1142 = vadd.f32 %v895, %v1141
      %1143 = vmatmul.bf16.gmra.mxu0 %v988
      %v1144 = vpop.f32.mrf.mxu0
      %v1145 = vadd.f32 %v895, %v1144
      %v1146 = vpop.f32.mrf.mxu0
      %v1147 = vadd.f32 %v895, %v1146
      %1148 = vmatmul.bf16.gmra.mxu0 %v991
      %v1149 = vpop.f32.mrf.mxu0
      %v1150 = vadd.f32 %v895, %v1149
      %v1151 = vpop.f32.mrf.mxu0
      %v1152 = vadd.f32 %v895, %v1151
      %1153 = vmatmul.bf16.gmra.mxu0 %v994
      %v1154 = vpop.f32.mrf.mxu0
      %v1155 = vadd.f32 %v895, %v1154
      %v1156 = vpop.f32.mrf.mxu0
      %v1157 = vadd.f32 %v895, %v1156
      %1158 = vmatmul.bf16.gmra.mxu0 %v997
      %v1159 = vpop.f32.mrf.mxu0
      %v1160 = vadd.f32 %v895, %v1159
      %v1161 = vpop.f32.mrf.mxu0
      %v1162 = vadd.f32 %v895, %v1161
      %1163 = vmatmul.bf16.gmra.mxu0 %v1000
      %v1164 = vpop.f32.mrf.mxu0
      %v1165 = vadd.f32 %v895, %v1164
      %v1166 = vpop.f32.mrf.mxu0
      %v1167 = vadd.f32 %v895, %v1166
      %1168 = vmatmul.bf16.gmra.mxu0 %v1003
      %v1169 = vpop.f32.mrf.mxu0
      %v1170 = vadd.f32 %v895, %v1169
      %v1171 = vpop.f32.mrf.mxu0
      %v1172 = vadd.f32 %v895, %v1171
      %1173 = vdwg.mxu0
      %v1174 = vmax.f32 %v1015, 0.0
      %v1175 = vmax.f32 %v1017, 0.0
      %v1176 = vmax.f32 %v1020, 0.0
      %v1177 = vmax.f32 %v1022, 0.0
      %v1178 = vmax.f32 %v1025, 0.0
      %v1179 = vmax.f32 %v1027, 0.0
      %v1180 = vmax.f32 %v1030, 0.0
      %v1181 = vmax.f32 %v1032, 0.0
      %v1182 = vmax.f32 %v1035, 0.0
      %v1183 = vmax.f32 %v1037, 0.0
      %v1184 = vmax.f32 %v1040, 0.0
      %v1185 = vmax.f32 %v1042, 0.0
      %v1186 = vmax.f32 %v1045, 0.0
      %v1187 = vmax.f32 %v1047, 0.0
      %v1188 = vmax.f32 %v1050, 0.0
      %v1189 = vmax.f32 %v1052, 0.0
      %v1190 = vmax.f32 %v1055, 0.0
      %v1191 = vmax.f32 %v1057, 0.0
      %v1192 = vmax.f32 %v1060, 0.0
      %v1193 = vmax.f32 %v1062, 0.0
      %v1194 = vmax.f32 %v1065, 0.0
      %v1195 = vmax.f32 %v1067, 0.0
      %v1196 = vmax.f32 %v1070, 0.0
      %v1197 = vmax.f32 %v1072, 0.0
      %v1198 = vmax.f32 %v1075, 0.0
      %v1199 = vmax.f32 %v1077, 0.0
      %v1200 = vmax.f32 %v1080, 0.0
      %v1201 = vmax.f32 %v1082, 0.0
      %v1202 = vmax.f32 %v1085, 0.0
      %v1203 = vmax.f32 %v1087, 0.0
      %v1204 = vmax.f32 %v1090, 0.0
      %v1205 = vmax.f32 %v1092, 0.0
      %v1206 = vmax.f32 %v1095, 0.0
      %v1207 = vmax.f32 %v1097, 0.0
      %v1208 = vmax.f32 %v1100, 0.0
      %v1209 = vmax.f32 %v1102, 0.0
      %v1210 = vmax.f32 %v1105, 0.0
      %v1211 = vmax.f32 %v1107, 0.0
      %v1212 = vmax.f32 %v1110, 0.0
      %v1213 = vmax.f32 %v1112, 0.0
      %v1214 = vmax.f32 %v1115, 0.0
      %v1215 = vmax.f32 %v1117, 0.0
      %v1216 = vmax.f32 %v1120, 0.0
      %v1217 = vmax.f32 %v1122, 0.0
      %v1218 = vmax.f32 %v1125, 0.0
      %v1219 = vmax.f32 %v1127, 0.0
      %v1220 = vmax.f32 %v1130, 0.0
      %v1221 = vmax.f32 %v1132, 0.0
      %v1222 = vmax.f32 %v1135, 0.0
      %v1223 = vmax.f32 %v1137, 0.0
      %v1224 = vmax.f32 %v1140, 0.0
      %v1225 = vmax.f32 %v1142, 0.0
      %v1226 = vmax.f32 %v1145, 0.0
      %v1227 = vmax.f32 %v1147, 0.0
      %v1228 = vmax.f32 %v1150, 0.0
      %v1229 = vmax.f32 %v1152, 0.0
      %v1230 = vmax.f32 %v1155, 0.0
      %v1231 = vmax.f32 %v1157, 0.0
      %v1232 = vmax.f32 %v1160, 0.0
      %v1233 = vmax.f32 %v1162, 0.0
      %v1234 = vmax.f32 %v1165, 0.0
      %v1235 = vmax.f32 %v1167, 0.0
      %v1236 = vmax.f32 %v1170, 0.0
      %v1237 = vmax.f32 %v1172, 0.0
      %v1238 = vpack.c.bf16 %v1175, %v1174
      %v1239 = vpack.c.bf16 %v1177, %v1176
      %v1240 = vpack.c.bf16 %v1179, %v1178
      %v1241 = vpack.c.bf16 %v1181, %v1180
      %v1242 = vpack.c.bf16 %v1183, %v1182
      %v1243 = vpack.c.bf16 %v1185, %v1184
      %v1244 = vpack.c.bf16 %v1187, %v1186
      %v1245 = vpack.c.bf16 %v1189, %v1188
      %v1246 = vpack.c.bf16 %v1191, %v1190
      %v1247 = vpack.c.bf16 %v1193, %v1192
      %v1248 = vpack.c.bf16 %v1195, %v1194
      %v1249 = vpack.c.bf16 %v1197, %v1196
      %v1250 = vpack.c.bf16 %v1199, %v1198
      %v1251 = vpack.c.bf16 %v1201, %v1200
      %v1252 = vpack.c.bf16 %v1203, %v1202
      %v1253 = vpack.c.bf16 %v1205, %v1204
      %v1254 = vpack.c.bf16 %v1207, %v1206
      %v1255 = vpack.c.bf16 %v1209, %v1208
      %v1256 = vpack.c.bf16 %v1211, %v1210
      %v1257 = vpack.c.bf16 %v1213, %v1212
      %v1258 = vpack.c.bf16 %v1215, %v1214
      %v1259 = vpack.c.bf16 %v1217, %v1216
      %v1260 = vpack.c.bf16 %v1219, %v1218
      %v1261 = vpack.c.bf16 %v1221, %v1220
      %v1262 = vpack.c.bf16 %v1223, %v1222
      %v1263 = vpack.c.bf16 %v1225, %v1224
      %v1264 = vpack.c.bf16 %v1227, %v1226
      %v1265 = vpack.c.bf16 %v1229, %v1228
      %v1266 = vpack.c.bf16 %v1231, %v1230
      %v1267 = vpack.c.bf16 %v1233, %v1232
      %v1268 = vpack.c.bf16 %v1235, %v1234
      %v1269 = vpack.c.bf16 %v1237, %v1236
      %v1270 = vld [vmem:[%s5] sm:$0xf]
      %v1271 = vld [vmem:[%s5 + $0x4] sm:$0xf]
      %v1272 = vld [vmem:[%s5 + $0x8] sm:$0xf]
      %v1273 = vld [vmem:[%s5 + $0xc] sm:$0xf]
      %v1274 = vld [vmem:[%s6] sm:$0x1]
      %v1276 = vperm.slane %v1274, 0
      %v1282 = vunpack.c.l.b16 %v1270
      %v1283 = vunpack.c.l.b16 %v1271
      %v1284 = vunpack.c.l.b16 %v1272
      %v1285 = vunpack.c.l.b16 %v1273
      %v1286 = vpack.c.b16 %v1283, %v1282
      %v1287 = vpack.c.b16 %v1285, %v1284
      %v1291 = vsel %vm527, %v1238, 0
      %v1294 = vsel %vm527, %v1239, 0
      %v1297 = vsel %vm527, %v1240, 0
      %v1300 = vsel %vm527, %v1241, 0
      %v1303 = vsel %vm527, %v1242, 0
      %v1306 = vsel %vm527, %v1243, 0
      %v1309 = vsel %vm527, %v1244, 0
      %v1312 = vsel %vm527, %v1245, 0
      %v1315 = vsel %vm527, %v1246, 0
      %v1318 = vsel %vm527, %v1247, 0
      %v1321 = vsel %vm527, %v1248, 0
      %v1324 = vsel %vm527, %v1249, 0
      %v1327 = vsel %vm527, %v1250, 0
      %v1330 = vsel %vm527, %v1251, 0
      %v1333 = vsel %vm527, %v1252, 0
      %v1336 = vsel %vm527, %v1253, 0
      %v1339 = vsel %vm527, %v1254, 0
      %v1342 = vsel %vm527, %v1255, 0
      %v1345 = vsel %vm527, %v1256, 0
      %v1348 = vsel %vm527, %v1257, 0
      %v1351 = vsel %vm527, %v1258, 0
      %v1354 = vsel %vm527, %v1259, 0
      %v1357 = vsel %vm527, %v1260, 0
      %v1360 = vsel %vm527, %v1261, 0
      %v1363 = vsel %vm527, %v1262, 0
      %v1366 = vsel %vm527, %v1263, 0
      %v1369 = vsel %vm527, %v1264, 0
      %v1372 = vsel %vm527, %v1265, 0
      %v1375 = vsel %vm527, %v1266, 0
      %v1378 = vsel %vm527, %v1267, 0
      %v1381 = vsel %vm527, %v1268, 0
      %v1384 = vsel %vm527, %v1269, 0
      %1386 = vmatpush.bf16.msra.mxu0 0
      %1387 = vmatpush.bf16.msra.mxu0 0
      %1388 = vmatpush.bf16.msra.mxu0 0
      %1389 = vmatpush.bf16.msra.mxu0 0
      %1390 = vmatpush.bf16.msra.mxu0 0
      %1391 = vmatpush.bf16.msra.mxu0 0
      %1392 = vmatpush.bf16.msra.mxu0 %v1287
      %1393 = vmatpush.bf16.msra.mxu0 %v1286
      %1394 = vmatmul.bf16.gmra.mxu0 %v1291
      %v1395 = vpop.f32.mrf.mxu0
      %v1396 = vadd.f32 %v1276, %v1395
      %v1397 = vpop.f32.mrf.mxu0
      %v1398 = vadd.f32 %v1276, %v1397
      %1399 = vmatmul.bf16.gmra.mxu0 %v1294
      %v1400 = vpop.f32.mrf.mxu0
      %v1401 = vadd.f32 %v1276, %v1400
      %v1402 = vpop.f32.mrf.mxu0
      %v1403 = vadd.f32 %v1276, %v1402
      %1404 = vmatmul.bf16.gmra.mxu0 %v1297
      %v1405 = vpop.f32.mrf.mxu0
      %v1406 = vadd.f32 %v1276, %v1405
      %v1407 = vpop.f32.mrf.mxu0
      %v1408 = vadd.f32 %v1276, %v1407
      %1409 = vmatmul.bf16.gmra.mxu0 %v1300
      %v1410 = vpop.f32.mrf.mxu0
      %v1411 = vadd.f32 %v1276, %v1410
      %v1412 = vpop.f32.mrf.mxu0
      %v1413 = vadd.f32 %v1276, %v1412
      %1414 = vmatmul.bf16.gmra.mxu0 %v1303
      %v1415 = vpop.f32.mrf.mxu0
      %v1416 = vadd.f32 %v1276, %v1415
      %v1417 = vpop.f32.mrf.mxu0
      %v1418 = vadd.f32 %v1276, %v1417
      %1419 = vmatmul.bf16.gmra.mxu0 %v1306
      %v1420 = vpop.f32.mrf.mxu0
      %v1421 = vadd.f32 %v1276, %v1420
      %v1422 = vpop.f32.mrf.mxu0
      %v1423 = vadd.f32 %v1276, %v1422
      %1424 = vmatmul.bf16.gmra.mxu0 %v1309
      %v1425 = vpop.f32.mrf.mxu0
      %v1426 = vadd.f32 %v1276, %v1425
      %v1427 = vpop.f32.mrf.mxu0
      %v1428 = vadd.f32 %v1276, %v1427
      %1429 = vmatmul.bf16.gmra.mxu0 %v1312
      %v1430 = vpop.f32.mrf.mxu0
      %v1431 = vadd.f32 %v1276, %v1430
      %v1432 = vpop.f32.mrf.mxu0
      %v1433 = vadd.f32 %v1276, %v1432
      %1434 = vmatmul.bf16.gmra.mxu0 %v1315
      %v1435 = vpop.f32.mrf.mxu0
      %v1436 = vadd.f32 %v1276, %v1435
      %v1437 = vpop.f32.mrf.mxu0
      %v1438 = vadd.f32 %v1276, %v1437
      %1439 = vmatmul.bf16.gmra.mxu0 %v1318
      %v1440 = vpop.f32.mrf.mxu0
      %v1441 = vadd.f32 %v1276, %v1440
      %v1442 = vpop.f32.mrf.mxu0
      %v1443 = vadd.f32 %v1276, %v1442
      %1444 = vmatmul.bf16.gmra.mxu0 %v1321
      %v1445 = vpop.f32.mrf.mxu0
      %v1446 = vadd.f32 %v1276, %v1445
      %v1447 = vpop.f32.mrf.mxu0
      %v1448 = vadd.f32 %v1276, %v1447
      %1449 = vmatmul.bf16.gmra.mxu0 %v1324
      %v1450 = vpop.f32.mrf.mxu0
      %v1451 = vadd.f32 %v1276, %v1450
      %v1452 = vpop.f32.mrf.mxu0
      %v1453 = vadd.f32 %v1276, %v1452
      %1454 = vmatmul.bf16.gmra.mxu0 %v1327
      %v1455 = vpop.f32.mrf.mxu0
      %v1456 = vadd.f32 %v1276, %v1455
      %v1457 = vpop.f32.mrf.mxu0
      %v1458 = vadd.f32 %v1276, %v1457
      %1459 = vmatmul.bf16.gmra.mxu0 %v1330
      %v1460 = vpop.f32.mrf.mxu0
      %v1461 = vadd.f32 %v1276, %v1460
      %v1462 = vpop.f32.mrf.mxu0
      %v1463 = vadd.f32 %v1276, %v1462
      %1464 = vmatmul.bf16.gmra.mxu0 %v1333
      %v1465 = vpop.f32.mrf.mxu0
      %v1466 = vadd.f32 %v1276, %v1465
      %v1467 = vpop.f32.mrf.mxu0
      %v1468 = vadd.f32 %v1276, %v1467
      %1469 = vmatmul.bf16.gmra.mxu0 %v1336
      %v1470 = vpop.f32.mrf.mxu0
      %v1471 = vadd.f32 %v1276, %v1470
      %v1472 = vpop.f32.mrf.mxu0
      %v1473 = vadd.f32 %v1276, %v1472
      %1474 = vmatmul.bf16.gmra.mxu0 %v1339
      %v1475 = vpop.f32.mrf.mxu0
      %v1476 = vadd.f32 %v1276, %v1475
      %v1477 = vpop.f32.mrf.mxu0
      %v1478 = vadd.f32 %v1276, %v1477
      %1479 = vmatmul.bf16.gmra.mxu0 %v1342
      %v1480 = vpop.f32.mrf.mxu0
      %v1481 = vadd.f32 %v1276, %v1480
      %v1482 = vpop.f32.mrf.mxu0
      %v1483 = vadd.f32 %v1276, %v1482
      %1484 = vmatmul.bf16.gmra.mxu0 %v1345
      %v1485 = vpop.f32.mrf.mxu0
      %v1486 = vadd.f32 %v1276, %v1485
      %v1487 = vpop.f32.mrf.mxu0
      %v1488 = vadd.f32 %v1276, %v1487
      %1489 = vmatmul.bf16.gmra.mxu0 %v1348
      %v1490 = vpop.f32.mrf.mxu0
      %v1491 = vadd.f32 %v1276, %v1490
      %v1492 = vpop.f32.mrf.mxu0
      %v1493 = vadd.f32 %v1276, %v1492
      %1494 = vmatmul.bf16.gmra.mxu0 %v1351
      %v1495 = vpop.f32.mrf.mxu0
      %v1496 = vadd.f32 %v1276, %v1495
      %v1497 = vpop.f32.mrf.mxu0
      %v1498 = vadd.f32 %v1276, %v1497
      %1499 = vmatmul.bf16.gmra.mxu0 %v1354
      %v1500 = vpop.f32.mrf.mxu0
      %v1501 = vadd.f32 %v1276, %v1500
      %v1502 = vpop.f32.mrf.mxu0
      %v1503 = vadd.f32 %v1276, %v1502
      %1504 = vmatmul.bf16.gmra.mxu0 %v1357
      %v1505 = vpop.f32.mrf.mxu0
      %v1506 = vadd.f32 %v1276, %v1505
      %v1507 = vpop.f32.mrf.mxu0
      %v1508 = vadd.f32 %v1276, %v1507
      %1509 = vmatmul.bf16.gmra.mxu0 %v1360
      %v1510 = vpop.f32.mrf.mxu0
      %v1511 = vadd.f32 %v1276, %v1510
      %v1512 = vpop.f32.mrf.mxu0
      %v1513 = vadd.f32 %v1276, %v1512
      %1514 = vmatmul.bf16.gmra.mxu0 %v1363
      %v1515 = vpop.f32.mrf.mxu0
      %v1516 = vadd.f32 %v1276, %v1515
      %v1517 = vpop.f32.mrf.mxu0
      %v1518 = vadd.f32 %v1276, %v1517
      %1519 = vmatmul.bf16.gmra.mxu0 %v1366
      %v1520 = vpop.f32.mrf.mxu0
      %v1521 = vadd.f32 %v1276, %v1520
      %v1522 = vpop.f32.mrf.mxu0
      %v1523 = vadd.f32 %v1276, %v1522
      %1524 = vmatmul.bf16.gmra.mxu0 %v1369
      %v1525 = vpop.f32.mrf.mxu0
      %v1526 = vadd.f32 %v1276, %v1525
      %v1527 = vpop.f32.mrf.mxu0
      %v1528 = vadd.f32 %v1276, %v1527
      %1529 = vmatmul.bf16.gmra.mxu0 %v1372
      %v1530 = vpop.f32.mrf.mxu0
      %v1531 = vadd.f32 %v1276, %v1530
      %v1532 = vpop.f32.mrf.mxu0
      %v1533 = vadd.f32 %v1276, %v1532
      %1534 = vmatmul.bf16.gmra.mxu0 %v1375
      %v1535 = vpop.f32.mrf.mxu0
      %v1536 = vadd.f32 %v1276, %v1535
      %v1537 = vpop.f32.mrf.mxu0
      %v1538 = vadd.f32 %v1276, %v1537
      %1539 = vmatmul.bf16.gmra.mxu0 %v1378
      %v1540 = vpop.f32.mrf.mxu0
      %v1541 = vadd.f32 %v1276, %v1540
      %v1542 = vpop.f32.mrf.mxu0
      %v1543 = vadd.f32 %v1276, %v1542
      %1544 = vmatmul.bf16.gmra.mxu0 %v1381
      %v1545 = vpop.f32.mrf.mxu0
      %v1546 = vadd.f32 %v1276, %v1545
      %v1547 = vpop.f32.mrf.mxu0
      %v1548 = vadd.f32 %v1276, %v1547
      %1549 = vmatmul.bf16.gmra.mxu0 %v1384
      %v1550 = vpop.f32.mrf.mxu0
      %v1551 = vadd.f32 %v1276, %v1550
      %v1552 = vpop.f32.mrf.mxu0
      %v1553 = vadd.f32 %v1276, %v1552
      %1554 = vdwg.mxu0
      %vm1555 = vcmask 130048
      %1556 = vst.msk [vmem:[%s280] sm:$0xff] %vm1555, %v1396
      %1557 = vst.msk [vmem:[%s280 + $0x8] sm:$0xff] %vm1555, %v1398
      %1558 = vst.msk [vmem:[%s280 + $0x10] sm:$0xff] %vm1555, %v1401
      %1559 = vst.msk [vmem:[%s280 + $0x18] sm:$0xff] %vm1555, %v1403
      %1560 = vst.msk [vmem:[%s280 + $0x20] sm:$0xff] %vm1555, %v1406
      %1561 = vst.msk [vmem:[%s280 + $0x28] sm:$0xff] %vm1555, %v1408
      %1562 = vst.msk [vmem:[%s280 + $0x30] sm:$0xff] %vm1555, %v1411
      %1563 = vst.msk [vmem:[%s280 + $0x38] sm:$0xff] %vm1555, %v1413
      %1564 = vst.msk [vmem:[%s280 + $0x40] sm:$0xff] %vm1555, %v1416
      %1565 = vst.msk [vmem:[%s280 + $0x48] sm:$0xff] %vm1555, %v1418
      %1566 = vst.msk [vmem:[%s280 + $0x50] sm:$0xff] %vm1555, %v1421
      %1567 = vst.msk [vmem:[%s280 + $0x58] sm:$0xff] %vm1555, %v1423
      %1568 = vst.msk [vmem:[%s280 + $0x60] sm:$0xff] %vm1555, %v1426
      %1569 = vst.msk [vmem:[%s280 + $0x68] sm:$0xff] %vm1555, %v1428
      %1570 = vst.msk [vmem:[%s280 + $0x70] sm:$0xff] %vm1555, %v1431
      %1571 = vst.msk [vmem:[%s280 + $0x78] sm:$0xff] %vm1555, %v1433
      %1572 = vst.msk [vmem:[%s280 + $0x80] sm:$0xff] %vm1555, %v1436
      %1573 = vst.msk [vmem:[%s280 + $0x88] sm:$0xff] %vm1555, %v1438
      %1574 = vst.msk [vmem:[%s280 + $0x90] sm:$0xff] %vm1555, %v1441
      %1575 = vst.msk [vmem:[%s280 + $0x98] sm:$0xff] %vm1555, %v1443
      %1576 = vst.msk [vmem:[%s280 + $0xa0] sm:$0xff] %vm1555, %v1446
      %1577 = vst.msk [vmem:[%s280 + $0xa8] sm:$0xff] %vm1555, %v1448
      %1578 = vst.msk [vmem:[%s280 + $0xb0] sm:$0xff] %vm1555, %v1451
      %1579 = vst.msk [vmem:[%s280 + $0xb8] sm:$0xff] %vm1555, %v1453
      %1580 = vst.msk [vmem:[%s280 + $0xc0] sm:$0xff] %vm1555, %v1456
      %1581 = vst.msk [vmem:[%s280 + $0xc8] sm:$0xff] %vm1555, %v1458
      %1582 = vst.msk [vmem:[%s280 + $0xd0] sm:$0xff] %vm1555, %v1461
      %1583 = vst.msk [vmem:[%s280 + $0xd8] sm:$0xff] %vm1555, %v1463
      %1584 = vst.msk [vmem:[%s280 + $0xe0] sm:$0xff] %vm1555, %v1466
      %1585 = vst.msk [vmem:[%s280 + $0xe8] sm:$0xff] %vm1555, %v1468
      %1586 = vst.msk [vmem:[%s280 + $0xf0] sm:$0xff] %vm1555, %v1471
      %1587 = vst.msk [vmem:[%s280 + $0xf8] sm:$0xff] %vm1555, %v1473
      %1588 = vst.msk [vmem:[%s280 + $0x100] sm:$0xff] %vm1555, %v1476
      %1589 = vst.msk [vmem:[%s280 + $0x108] sm:$0xff] %vm1555, %v1478
      %1590 = vst.msk [vmem:[%s280 + $0x110] sm:$0xff] %vm1555, %v1481
      %1591 = vst.msk [vmem:[%s280 + $0x118] sm:$0xff] %vm1555, %v1483
      %1592 = vst.msk [vmem:[%s280 + $0x120] sm:$0xff] %vm1555, %v1486
      %1593 = vst.msk [vmem:[%s280 + $0x128] sm:$0xff] %vm1555, %v1488
      %1594 = vst.msk [vmem:[%s280 + $0x130] sm:$0xff] %vm1555, %v1491
      %1595 = vst.msk [vmem:[%s280 + $0x138] sm:$0xff] %vm1555, %v1493
      %1596 = vst.msk [vmem:[%s280 + $0x140] sm:$0xff] %vm1555, %v1496
      %1597 = vst.msk [vmem:[%s280 + $0x148] sm:$0xff] %vm1555, %v1498
      %1598 = vst.msk [vmem:[%s280 + $0x150] sm:$0xff] %vm1555, %v1501
      %1599 = vst.msk [vmem:[%s280 + $0x158] sm:$0xff] %vm1555, %v1503
      %1600 = vst.msk [vmem:[%s280 + $0x160] sm:$0xff] %vm1555, %v1506
      %1601 = vst.msk [vmem:[%s280 + $0x168] sm:$0xff] %vm1555, %v1508
      %1602 = vst.msk [vmem:[%s280 + $0x170] sm:$0xff] %vm1555, %v1511
      %1603 = vst.msk [vmem:[%s280 + $0x178] sm:$0xff] %vm1555, %v1513
      %1604 = vst.msk [vmem:[%s280 + $0x180] sm:$0xff] %vm1555, %v1516
      %1605 = vst.msk [vmem:[%s280 + $0x188] sm:$0xff] %vm1555, %v1518
      %1606 = vst.msk [vmem:[%s280 + $0x190] sm:$0xff] %vm1555, %v1521
      %1607 = vst.msk [vmem:[%s280 + $0x198] sm:$0xff] %vm1555, %v1523
      %1608 = vst.msk [vmem:[%s280 + $0x1a0] sm:$0xff] %vm1555, %v1526
      %1609 = vst.msk [vmem:[%s280 + $0x1a8] sm:$0xff] %vm1555, %v1528
      %1610 = vst.msk [vmem:[%s280 + $0x1b0] sm:$0xff] %vm1555, %v1531
      %1611 = vst.msk [vmem:[%s280 + $0x1b8] sm:$0xff] %vm1555, %v1533
      %1612 = vst.msk [vmem:[%s280 + $0x1c0] sm:$0xff] %vm1555, %v1536
      %1613 = vst.msk [vmem:[%s280 + $0x1c8] sm:$0xff] %vm1555, %v1538
      %1614 = vst.msk [vmem:[%s280 + $0x1d0] sm:$0xff] %vm1555, %v1541
      %1615 = vst.msk [vmem:[%s280 + $0x1d8] sm:$0xff] %vm1555, %v1543
      %1616 = vst.msk [vmem:[%s280 + $0x1e0] sm:$0xff] %vm1555, %v1546
      %1617 = vst.msk [vmem:[%s280 + $0x1e8] sm:$0xff] %vm1555, %v1548
      %1618 = vst.msk [vmem:[%s280 + $0x1f0] sm:$0xff] %vm1555, %v1551
      %1619 = vst.msk [vmem:[%s280 + $0x1f8] sm:$0xff] %vm1555, %v1553
      %s1620 = smul.u32 64, %s18
      %p1621 = scmp.lt.s32.totalorder %s1620, 127
      %s1622 = scalar_select %p1621, %s1620, 127
      %s1623 = smul.addr %s1622, 8
      %s1624 = scalar_lea.vmem %s7, %s1623
      // Predicated region
      $region49: #{edge_model_forward.1} parent=47 // pred_check
        %p1625 = pneg %p188
      $region50: #{edge_model_forward.1} parent=47 // pred_check_branch
        %1627 = sbr.rel (%p1625) target = $region52
      $region51: #{edge_model_forward.1} parent=47 // pred_region
        %s1628 = smul.u32 64, %s18
      $region52: #{edge_model_forward.1} parent=47 // pred_fallthru
        _
    $region48: #{edge_model_forward.1} parent=5 // pred_fallthru
      _
    %p1629 = scmp.le.s32.totalorder 2, %s13
    // Predicated region
    $region53: #{edge_model_forward.1} parent=5 // pred_check
      %p1630 = pneg %p1629
    $region54: #{edge_model_forward.1} parent=5 // pred_check_branch
      %1632 = sbr.rel (%p1630) target = $region56
    $region55: #{edge_model_forward.1} parent=5 // pred_region
      %s1633 = ssub.s32 %s13, 2
      // Predicated region
      $region57: #{edge_model_forward.1} parent=55 // pred_check
        %p1634 = pneg %p194
      $region58: #{edge_model_forward.1} parent=55 // pred_check_branch
        %1636 = sbr.rel (%p1634) target = $region60
      $region59: #{edge_model_forward.1} parent=55 // pred_region
        %s1637 = smul.u32 64, %s19
        %p1638 = scmp.lt.s32.totalorder %s1637, 127
        %s1639 = scalar_select %p1638, %s1637, 127
        %s1640 = smul.addr %s1639, 8
        %s1641 = scalar_lea.vmem %s7, %s1640
      $region60: #{edge_model_forward.1} parent=55 // pred_fallthru
        _
    $region56: #{edge_model_forward.1} parent=5 // pred_fallthru
      _
  $region6: #{edge_model_forward.1} parent=0 // loop_footer
    %s17 = sadd.s32 1, %s13
  $region7: #{edge_model_forward.1} parent=0 // loop_footer_branch
    %12 = sbr.rel target = $region3
  $region8: #{edge_model_forward.1} parent=0 // loop_exit
    _

</llo_original>
